<compile_context>
chip_gen: v7x
topology: tpu7x:2x2x1
jax: 0.10.0
libtpu: 0.0.40
codegen_flags: <defaults>
</compile_context>

<pallas_src>
import numpy as np

import jax
import jax.numpy as jnp
from jax.experimental import pallas as pl
from jax.experimental.pallas import tpu as pltpu

_VMEM_LIMIT = 48 * 1024 * 1024  # fits v5e/v6e/v7x scoped-VMEM budgets


# ---------------------------------------------------------------------------
# In-kernel im2col on the row-padded flattened-spatial layout.
# ---------------------------------------------------------------------------
def _taps_flat(xf, Wp, Sv):
    """xf: (C, Sf) zero-padded image flattened row-major (+2 tail zeros).

    Returns (9*C, Sv) with Sv = H*Wp; row order = (dy*3+dx)*C + c, matching
    w.reshape(9*C, Cout).  Output columns p = h*Wp + w with w >= W are wrap
    columns and must be masked by the caller.
    """
    parts = []
    for dy in range(3):
        for dx in range(3):
            s = dy * Wp + dx
            parts.append(xf[:, s:s + Sv])       # 1-D lane slice only
    return jnp.concatenate(parts, axis=0)


# ---------------------------------------------------------------------------
# Kernel 1: conv1 = 3x3 conv over the (virtual) concat([x2, x1_upsampled]),
# bias, per-batch-element BN partial stats; output stored in padded-flat
# layout so conv2 needs no re-padding pass.
# ---------------------------------------------------------------------------
def conv1_fused(x2f, x1f, w_t, b, mask_v, H, W):
    N, C2, Sf = x2f.shape
    C1 = x1f.shape[1]
    Cmid, K = w_t.shape
    Wp = W + 2
    Sv = H * Wp
    assert Sf == (H + 2) * Wp + 2

    def kernel(x2_ref, x1_ref, w_ref, b_ref, m_ref, y_ref, s_ref, q_ref):
        patch = jnp.concatenate(
            [_taps_flat(x2_ref[0], Wp, Sv),
             _taps_flat(x1_ref[0], Wp, Sv)], axis=0)            # (K, Sv) bf16
        acc = jax.lax.dot_general(
            w_ref[...], patch, (((1,), (0,)), ((), ())),
            preferred_element_type=jnp.float32)                 # (Cmid, Sv)
        acc = (acc + b_ref[...]) * m_ref[...]                   # mask wrap cols
        # single cross-lane reduction per channel for the batch statistics
        s_ref[...] = jnp.sum(acc, axis=1)[None, None, :]
        q_ref[...] = jnp.sum(acc * acc, axis=1)[None, None, :]
        # place the valid outputs at interior positions of the padded-flat
        # output (shift by Wp+1); masked wrap columns land exactly on the
        # zero-padding columns.
        zpre = jnp.zeros((Cmid, Wp + 1), jnp.float32)
        zpost = jnp.zeros((Cmid, Sf - Sv - (Wp + 1)), jnp.float32)
        y_ref[...] = jnp.concatenate([zpre, acc, zpost], axis=1)[None]

    return pl.pallas_call(
        kernel,
        out_shape=(jax.ShapeDtypeStruct((N, Cmid, Sf), jnp.float32),
                   jax.ShapeDtypeStruct((N, 1, Cmid), jnp.float32),
                   jax.ShapeDtypeStruct((N, 1, Cmid), jnp.float32)),
        grid_spec=pltpu.PrefetchScalarGridSpec(
            num_scalar_prefetch=0,
            grid=(N,),
            in_specs=[
                pl.BlockSpec((1, C2, Sf), lambda n: (n, 0, 0)),
                pl.BlockSpec((1, C1, Sf), lambda n: (n, 0, 0)),
                pl.BlockSpec((Cmid, K), lambda n: (0, 0)),
                pl.BlockSpec((Cmid, 1), lambda n: (0, 0)),
                pl.BlockSpec((1, Sv), lambda n: (0, 0)),
            ],
            out_specs=(
                pl.BlockSpec((1, Cmid, Sf), lambda n: (n, 0, 0)),
                pl.BlockSpec((1, 1, Cmid), lambda n: (n, 0, 0)),
                pl.BlockSpec((1, 1, Cmid), lambda n: (n, 0, 0)),
            )),
        compiler_params=pltpu.CompilerParams(
            dimension_semantics=("parallel",),
            vmem_limit_bytes=_VMEM_LIMIT),
    )(x2f, x1f, w_t, b, mask_v)


# ---------------------------------------------------------------------------
# Kernel 2: conv2 with layer-1 BN-affine + ReLU fused into its input path,
# bias, per-batch-element BN partial stats.
# ---------------------------------------------------------------------------
def conv2_fused(y1f, scale1, shift1, w_t, b, mask_int, mask_v, H, W):
    N, Cmid, Sf = y1f.shape
    Cout, K = w_t.shape
    Wp = W + 2
    Sv = H * Wp

    def kernel(y_ref, sc_ref, sh_ref, w_ref, b_ref, mi_ref, mv_ref,
               o_ref, s_ref, q_ref):
        x = y_ref[0]                                            # (Cmid, Sf) f32
        # fused BatchNorm1 affine + ReLU; re-zero the halo so conv2 sees the
        # same zero padding PyTorch applies to relu(bn(conv1)).
        z = jnp.maximum(x * sc_ref[...] + sh_ref[...], 0.0) * mi_ref[...]
        patch = _taps_flat(z.astype(jnp.bfloat16), Wp, Sv)      # (9*Cmid, Sv)
        acc = jax.lax.dot_general(
            w_ref[...], patch, (((1,), (0,)), ((), ())),
            preferred_element_type=jnp.float32)                 # (Cout, Sv)
        acc = (acc + b_ref[...]) * mv_ref[...]
        s_ref[...] = jnp.sum(acc, axis=1)[None, None, :]
        q_ref[...] = jnp.sum(acc * acc, axis=1)[None, None, :]
        o_ref[...] = acc[None]

    return pl.pallas_call(
        kernel,
        out_shape=(jax.ShapeDtypeStruct((N, Cout, Sv), jnp.float32),
                   jax.ShapeDtypeStruct((N, 1, Cout), jnp.float32),
                   jax.ShapeDtypeStruct((N, 1, Cout), jnp.float32)),
        grid_spec=pltpu.PrefetchScalarGridSpec(
            num_scalar_prefetch=0,
            grid=(N,),
            in_specs=[
                pl.BlockSpec((1, Cmid, Sf), lambda n: (n, 0, 0)),
                pl.BlockSpec((Cmid, 1), lambda n: (0, 0)),
                pl.BlockSpec((Cmid, 1), lambda n: (0, 0)),
                pl.BlockSpec((Cout, K), lambda n: (0, 0)),
                pl.BlockSpec((Cout, 1), lambda n: (0, 0)),
                pl.BlockSpec((1, Sf), lambda n: (0, 0)),
                pl.BlockSpec((1, Sv), lambda n: (0, 0)),
            ],
            out_specs=(
                pl.BlockSpec((1, Cout, Sv), lambda n: (n, 0, 0)),
                pl.BlockSpec((1, 1, Cout), lambda n: (n, 0, 0)),
                pl.BlockSpec((1, 1, Cout), lambda n: (n, 0, 0)),
            )),
        compiler_params=pltpu.CompilerParams(
            dimension_semantics=("parallel",),
            vmem_limit_bytes=_VMEM_LIMIT),
    )(y1f, scale1, shift1, w_t, b, mask_int, mask_v)


# ---------------------------------------------------------------------------
# Kernel 3: layer-2 BN affine + ReLU (lane-dense elementwise pass).
# ---------------------------------------------------------------------------
def bn_relu_flat(y, scale, shift):
    N, C, S = y.shape

    def kernel(y_ref, sc_ref, sh_ref, o_ref):
        o_ref[...] = jnp.maximum(y_ref[0] * sc_ref[...] + sh_ref[...], 0.0)[None]

    return pl.pallas_call(
        kernel,
        out_shape=jax.ShapeDtypeStruct((N, C, S), jnp.float32),
        grid_spec=pltpu.PrefetchScalarGridSpec(
            num_scalar_prefetch=0,
            grid=(N,),
            in_specs=[
                pl.BlockSpec((1, C, S), lambda n: (n, 0, 0)),
                pl.BlockSpec((C, 1), lambda n: (0, 0)),
                pl.BlockSpec((C, 1), lambda n: (0, 0)),
            ],
            out_specs=pl.BlockSpec((1, C, S), lambda n: (n, 0, 0))),
        compiler_params=pltpu.CompilerParams(
            dimension_semantics=("parallel",),
            vmem_limit_bytes=_VMEM_LIMIT),
    )(y, scale, shift)


# ---------------------------------------------------------------------------
# Glue: BN batch statistics -> affine params (PyTorch training-mode BN2d).
# ---------------------------------------------------------------------------
def _bn_affine(psum, pssq, count, gamma, beta, eps=1e-5):
    s = jnp.sum(psum, axis=0)[0]        # (C,)
    ss = jnp.sum(pssq, axis=0)[0]
    mean = s / count
    var = jnp.maximum(ss / count - mean * mean, 0.0)   # biased variance
    scale = gamma * jax.lax.rsqrt(var + eps)
    shift = beta - mean * scale
    return scale[:, None], shift[:, None]


# ---------------------------------------------------------------------------
# Static helpers (numpy, folded into constants at trace time).
# ---------------------------------------------------------------------------
def _interp_matrix_align_corners(n_in, n_out):
    m = np.zeros((n_out, n_in), np.float32)
    if n_in == 1:
        m[:, 0] = 1.0
        return m
    src = np.arange(n_out, dtype=np.float64) * (n_in - 1) / (n_out - 1)
    i0 = np.clip(np.floor(src).astype(np.int64), 0, n_in - 1)
    i1 = np.minimum(i0 + 1, n_in - 1)
    w = (src - i0).astype(np.float32)
    m[np.arange(n_out), i0] += 1.0 - w
    m[np.arange(n_out), i1] += w
    return m


def _wrap_mask(H, W):
    Wp = W + 2
    m = np.zeros((H, Wp), np.float32)
    m[:, :W] = 1.0
    return m.reshape(1, H * Wp)


def _interior_mask(H, W):
    Wp = W + 2
    m = np.zeros((H + 2, Wp), np.float32)
    m[1:H + 1, 1:W + 1] = 1.0
    return np.concatenate([m.reshape(1, -1), np.zeros((1, 2), np.float32)], axis=1)


# ---------------------------------------------------------------------------
# Up.forward (bilinear=True)
# ---------------------------------------------------------------------------
@jax.jit
def up_forward(x1_nchw, x2_nchw, params):
    N, C1, H1, W1 = x1_nchw.shape
    _, C2, H2, W2 = x2_nchw.shape

    # bilinear x2 upsample (align_corners=True) as two interpolation matmuls
    Uh = jnp.asarray(_interp_matrix_align_corners(H1, 2 * H1))
    Uw = jnp.asarray(_interp_matrix_align_corners(W1, 2 * W1))
    x1u = jnp.einsum('oh,pw,nchw->ncop', Uh, Uw, x1_nchw)

    # F.pad to match the skip connection (usually a no-op)
    diffY = H2 - x1u.shape[2]
    diffX = W2 - x1u.shape[3]
    x1u = jnp.pad(x1u, ((0, 0), (0, 0),
                        (diffY // 2, diffY - diffY // 2),
                        (diffX // 2, diffX - diffX // 2)))

    H, W = H2, W2
    Wp = W + 2
    Sp = (H + 2) * Wp
    Sf = Sp + 2                       # +2 tail zeros so all tap slices are in-bounds

    def to_flat_bf16(x):
        xp = jnp.pad(x, ((0, 0), (0, 0), (1, 1), (1, 1)))
        xf = xp.reshape(x.shape[0], x.shape[1], Sp)
        return jnp.pad(xf, ((0, 0), (0, 0), (0, 2))).astype(jnp.bfloat16)

    x2f = to_flat_bf16(x2_nchw)
    x1f = to_flat_bf16(x1u)

    mask_v = jnp.asarray(_wrap_mask(H, W))        # (1, H*Wp)
    mask_int = jnp.asarray(_interior_mask(H, W))  # (1, Sf)

    Cmid = params['w1'].shape[-1]
    Cout = params['w2'].shape[-1]

    # split conv1's weight along Cin so torch.cat([x2, x1]) is never built
    w1 = params['w1']                                               # (3,3,Cin,Cmid)
    w1a = w1[:, :, :C2, :].reshape(9 * C2, Cmid)
    w1b = w1[:, :, C2:, :].reshape(9 * C1, Cmid)
    w1t = jnp.concatenate([w1a, w1b], axis=0).T.astype(jnp.bfloat16)   # (Cmid, 9*Cin)
    w2t = params['w2'].reshape(9 * Cmid, Cout).T.astype(jnp.bfloat16)  # (Cout, 9*Cmid)
    b1 = params['b1'][:, None].astype(jnp.float32)
    b2 = params['b2'][:, None].astype(jnp.float32)

    count = float(N * H * W)

    # conv1 (fused concat-split + halo handling + im2col + bias + batch stats)
    y1f, s1, q1 = conv1_fused(x2f, x1f, w1t, b1, mask_v, H, W)
    sc1, sh1 = _bn_affine(s1, q1, count, params['gamma1'], params['beta1'])

    # conv2 with layer-1 BN + ReLU fused into its input path
    y2, s2, q2 = conv2_fused(y1f, sc1, sh1, w2t, b2, mask_int, mask_v, H, W)
    sc2, sh2 = _bn_affine(s2, q2, count, params['gamma2'], params['beta2'])

    # layer-2 BN + ReLU
    z2 = bn_relu_flat(y2, sc2, sh2)

    # drop the wrap columns -> NCHW output (no layout transposes anywhere)
    return z2.reshape(N, Cout, H, Wp)[:, :, :, :W]


def init_up_params(key, in_channels, out_channels):
    # weight layout: (kh, kw, cin, cout); cin order = [x2 channels, x1 channels]
    mid_channels = in_channels // 2
    k1, k2, k3, k4 = jax.random.split(key, 4)
    return {
        "w1": 0.1 * jax.random.normal(k1, (3, 3, in_channels, mid_channels), jnp.float32),
        "b1": 0.1 * jax.random.normal(k2, (mid_channels,), jnp.float32),
        "gamma1": jnp.ones((mid_channels,), jnp.float32),
        "beta1": jnp.zeros((mid_channels,), jnp.float32),
        "w2": 0.1 * jax.random.normal(k3, (3, 3, mid_channels, out_channels), jnp.float32),
        "b2": 0.1 * jax.random.normal(k4, (out_channels,), jnp.float32),
        "gamma2": jnp.ones((out_channels,), jnp.float32),
        "beta2": jnp.zeros((out_channels,), jnp.float32),
    }


if __name__ == "__main__":
    key = jax.random.PRNGKey(0)
    kx1, kx2, kp = jax.random.split(key, 3)

    # x1: lower-resolution feature map; x2: skip connection at 2x spatial size.
    N, C1, H1, W1 = 2, 8, 8, 8
    C2, H2, W2 = 8, 16, 16
    in_channels = C1 + C2          # channels after (virtual) concat = 16
    out_channels = 8

    x1 = jax.random.normal(kx1, (N, C1, H1, W1), jnp.float32)   # NCHW
    x2 = jax.random.normal(kx2, (N, C2, H2, W2), jnp.float32)   # NCHW
    params = init_up_params(kp, in_channels, out_channels)

    out = up_forward(x1, x2, params)
    jax.block_until_ready(out)
    assert out.shape == (N, out_channels, H2, W2), out.shape
    print("KERNEL_OK")
</pallas_src>

<mosaic_0001>
module attributes {stable_mosaic.version = 11 : i64} {
  func.func @kernel(%arg0: i32, %arg1: memref<1x8x326xbf16, #tpu.memory_space<vmem>>, %arg2: memref<1x8x326xbf16, #tpu.memory_space<vmem>>, %arg3: memref<8x144xbf16, #tpu.memory_space<vmem>>, %arg4: memref<8x1xf32, #tpu.memory_space<vmem>>, %arg5: memref<1x288xf32, #tpu.memory_space<vmem>>, %arg6: memref<1x8x326xf32, #tpu.memory_space<vmem>>, %arg7: memref<1x1x8xf32, #tpu.memory_space<vmem>>, %arg8: memref<1x1x8xf32, #tpu.memory_space<vmem>>) attributes {dimension_semantics = [#tpu.dimension_semantics<parallel>], iteration_bounds = array<i64: 2>, scalar_prefetch = 0 : i64, scratch_operands = 0 : i64, tpu.core_type = #tpu.core_type<tc>, window_params = [{transform_indices = @transform_0, window_bounds = array<i64: 1, 8, 326>}, {transform_indices = @transform_1, window_bounds = array<i64: 1, 8, 326>}, {pipeline_mode = #tpu.pipeline_mode<synchronous>, transform_indices = @transform_2, window_bounds = array<i64: 8, 144>}, {pipeline_mode = #tpu.pipeline_mode<synchronous>, transform_indices = @transform_3, window_bounds = array<i64: 8, 1>}, {pipeline_mode = #tpu.pipeline_mode<synchronous>, transform_indices = @transform_4, window_bounds = array<i64: 1, 288>}, {transform_indices = @transform_5, window_bounds = array<i64: 1, 8, 326>}, {transform_indices = @transform_6, window_bounds = array<i64: 1, 1, 8>}, {transform_indices = @transform_7, window_bounds = array<i64: 1, 1, 8>}]} {
    %c0 = arith.constant 0 : index
    %c0_0 = arith.constant 0 : index
    %c0_1 = arith.constant 0 : index
    %0 = vector.load %arg1[%c0, %c0_0, %c0_1] : memref<1x8x326xbf16, #tpu.memory_space<vmem>>, vector<1x8x326xbf16>
    %1 = vector.shape_cast %0 : vector<1x8x326xbf16> to vector<8x326xbf16>
    %2 = vector.extract_strided_slice %1 {offsets = [0, 0], sizes = [8, 288], strides = [1, 1]} : vector<8x326xbf16> to vector<8x288xbf16>
    %3 = vector.extract_strided_slice %1 {offsets = [0, 1], sizes = [8, 288], strides = [1, 1]} : vector<8x326xbf16> to vector<8x288xbf16>
    %4 = vector.extract_strided_slice %1 {offsets = [0, 2], sizes = [8, 288], strides = [1, 1]} : vector<8x326xbf16> to vector<8x288xbf16>
    %5 = vector.extract_strided_slice %1 {offsets = [0, 18], sizes = [8, 288], strides = [1, 1]} : vector<8x326xbf16> to vector<8x288xbf16>
    %6 = vector.extract_strided_slice %1 {offsets = [0, 19], sizes = [8, 288], strides = [1, 1]} : vector<8x326xbf16> to vector<8x288xbf16>
    %7 = vector.extract_strided_slice %1 {offsets = [0, 20], sizes = [8, 288], strides = [1, 1]} : vector<8x326xbf16> to vector<8x288xbf16>
    %8 = vector.extract_strided_slice %1 {offsets = [0, 36], sizes = [8, 288], strides = [1, 1]} : vector<8x326xbf16> to vector<8x288xbf16>
    %9 = vector.extract_strided_slice %1 {offsets = [0, 37], sizes = [8, 288], strides = [1, 1]} : vector<8x326xbf16> to vector<8x288xbf16>
    %10 = vector.extract_strided_slice %1 {offsets = [0, 38], sizes = [8, 288], strides = [1, 1]} : vector<8x326xbf16> to vector<8x288xbf16>
    %11 = tpu.concatenate %2, %3, %4, %5, %6, %7, %8, %9, %10 in 0 : vector<8x288xbf16>, vector<8x288xbf16>, vector<8x288xbf16>, vector<8x288xbf16>, vector<8x288xbf16>, vector<8x288xbf16>, vector<8x288xbf16>, vector<8x288xbf16>, vector<8x288xbf16> -> vector<72x288xbf16>
    %c0_2 = arith.constant 0 : index
    %c0_3 = arith.constant 0 : index
    %c0_4 = arith.constant 0 : index
    %12 = vector.load %arg2[%c0_2, %c0_3, %c0_4] : memref<1x8x326xbf16, #tpu.memory_space<vmem>>, vector<1x8x326xbf16>
    %13 = vector.shape_cast %12 : vector<1x8x326xbf16> to vector<8x326xbf16>
    %14 = vector.extract_strided_slice %13 {offsets = [0, 0], sizes = [8, 288], strides = [1, 1]} : vector<8x326xbf16> to vector<8x288xbf16>
    %15 = vector.extract_strided_slice %13 {offsets = [0, 1], sizes = [8, 288], strides = [1, 1]} : vector<8x326xbf16> to vector<8x288xbf16>
    %16 = vector.extract_strided_slice %13 {offsets = [0, 2], sizes = [8, 288], strides = [1, 1]} : vector<8x326xbf16> to vector<8x288xbf16>
    %17 = vector.extract_strided_slice %13 {offsets = [0, 18], sizes = [8, 288], strides = [1, 1]} : vector<8x326xbf16> to vector<8x288xbf16>
    %18 = vector.extract_strided_slice %13 {offsets = [0, 19], sizes = [8, 288], strides = [1, 1]} : vector<8x326xbf16> to vector<8x288xbf16>
    %19 = vector.extract_strided_slice %13 {offsets = [0, 20], sizes = [8, 288], strides = [1, 1]} : vector<8x326xbf16> to vector<8x288xbf16>
    %20 = vector.extract_strided_slice %13 {offsets = [0, 36], sizes = [8, 288], strides = [1, 1]} : vector<8x326xbf16> to vector<8x288xbf16>
    %21 = vector.extract_strided_slice %13 {offsets = [0, 37], sizes = [8, 288], strides = [1, 1]} : vector<8x326xbf16> to vector<8x288xbf16>
    %22 = vector.extract_strided_slice %13 {offsets = [0, 38], sizes = [8, 288], strides = [1, 1]} : vector<8x326xbf16> to vector<8x288xbf16>
    %23 = tpu.concatenate %14, %15, %16, %17, %18, %19, %20, %21, %22 in 0 : vector<8x288xbf16>, vector<8x288xbf16>, vector<8x288xbf16>, vector<8x288xbf16>, vector<8x288xbf16>, vector<8x288xbf16>, vector<8x288xbf16>, vector<8x288xbf16>, vector<8x288xbf16> -> vector<72x288xbf16>
    %24 = tpu.concatenate %11, %23 in 0 : vector<72x288xbf16>, vector<72x288xbf16> -> vector<144x288xbf16>
    %c0_5 = arith.constant 0 : index
    %c0_6 = arith.constant 0 : index
    %25 = vector.load %arg3[%c0_5, %c0_6] : memref<8x144xbf16, #tpu.memory_space<vmem>>, vector<8x144xbf16>
    %cst = arith.constant dense<0.000000e+00> : vector<8x288xf32>
    %26 = tpu.matmul %25, %24, %cst {dimension_numbers = #tpu.dot_dimension_numbers<[1], [0], [0], [1], [0, 0, 1, 1], [], []>} : vector<8x144xbf16>, vector<144x288xbf16>, vector<8x288xf32> -> vector<8x288xf32>
    %c0_7 = arith.constant 0 : index
    %c0_8 = arith.constant 0 : index
    %27 = vector.load %arg4[%c0_7, %c0_8] : memref<8x1xf32, #tpu.memory_space<vmem>>, vector<8x1xf32>
    %28 = vector.broadcast %27 : vector<8x1xf32> to vector<8x288xf32>
    %29 = arith.addf %26, %28 : vector<8x288xf32>
    %c0_9 = arith.constant 0 : index
    %c0_10 = arith.constant 0 : index
    %30 = vector.load %arg5[%c0_9, %c0_10] : memref<1x288xf32, #tpu.memory_space<vmem>>, vector<1x288xf32>
    %31 = vector.broadcast %30 : vector<1x288xf32> to vector<8x288xf32>
    %32 = arith.mulf %29, %31 : vector<8x288xf32>
    %cst_11 = arith.constant dense<0.000000e+00> : vector<8xf32>
    %33 = vector.multi_reduction <add>, %32, %cst_11 [1] : vector<8x288xf32> to vector<8xf32>
    %34 = vector.shape_cast %33 : vector<8xf32> to vector<1x1x8xf32>
    %c0_12 = arith.constant 0 : index
    %c0_13 = arith.constant 0 : index
    %c0_14 = arith.constant 0 : index
    %35 = vector.load %arg7[%c0_12, %c0_13, %c0_14] : memref<1x1x8xf32, #tpu.memory_space<vmem>>, vector<1x1x8xf32>
    tpu.vector_store %arg7[%c0_12, %c0_13, %c0_14], %34 {strides = array<i32>} : memref<1x1x8xf32, #tpu.memory_space<vmem>>, vector<1x1x8xf32>,
    %36 = arith.mulf %32, %32 : vector<8x288xf32>
    %cst_15 = arith.constant dense<0.000000e+00> : vector<8xf32>
    %37 = vector.multi_reduction <add>, %36, %cst_15 [1] : vector<8x288xf32> to vector<8xf32>
    %38 = vector.shape_cast %37 : vector<8xf32> to vector<1x1x8xf32>
    %c0_16 = arith.constant 0 : index
    %c0_17 = arith.constant 0 : index
    %c0_18 = arith.constant 0 : index
    %39 = vector.load %arg8[%c0_16, %c0_17, %c0_18] : memref<1x1x8xf32, #tpu.memory_space<vmem>>, vector<1x1x8xf32>
    tpu.vector_store %arg8[%c0_16, %c0_17, %c0_18], %38 {strides = array<i32>} : memref<1x1x8xf32, #tpu.memory_space<vmem>>, vector<1x1x8xf32>,
    %cst_19 = arith.constant 0.000000e+00 : f32
    %40 = vector.broadcast %cst_19 : f32 to vector<8x19xf32>
    %cst_20 = arith.constant 0.000000e+00 : f32
    %41 = vector.broadcast %cst_20 : f32 to vector<8x19xf32>
    %42 = tpu.concatenate %40, %32, %41 in 1 : vector<8x19xf32>, vector<8x288xf32>, vector<8x19xf32> -> vector<8x326xf32>
    %43 = vector.shape_cast %42 : vector<8x326xf32> to vector<1x8x326xf32>
    %c0_21 = arith.constant 0 : index
    %c0_22 = arith.constant 0 : index
    %c0_23 = arith.constant 0 : index
    %44 = vector.load %arg6[%c0_21, %c0_22, %c0_23] : memref<1x8x326xf32, #tpu.memory_space<vmem>>, vector<1x8x326xf32>
    tpu.vector_store %arg6[%c0_21, %c0_22, %c0_23], %43 {strides = array<i32>} : memref<1x8x326xf32, #tpu.memory_space<vmem>>, vector<1x8x326xf32>,
    return
  }
  func.func @transform_0(%arg0: i32) -> (i32, i32, i32) {
    %c0_i32 = arith.constant 0 : i32
    %c0_i32_0 = arith.constant 0 : i32
    %c0_i32_1 = arith.constant 0 : i32
    return %arg0, %c0_i32, %c0_i32_0 : i32, i32, i32
  }
  func.func @transform_1(%arg0: i32) -> (i32, i32, i32) {
    %c0_i32 = arith.constant 0 : i32
    %c0_i32_0 = arith.constant 0 : i32
    %c0_i32_1 = arith.constant 0 : i32
    return %arg0, %c0_i32, %c0_i32_0 : i32, i32, i32
  }
  func.func @transform_2(%arg0: i32) -> (i32, i32) {
    %c0_i32 = arith.constant 0 : i32
    %c0_i32_0 = arith.constant 0 : i32
    %c0_i32_1 = arith.constant 0 : i32
    return %c0_i32, %c0_i32_0 : i32, i32
  }
  func.func @transform_3(%arg0: i32) -> (i32, i32) {
    %c0_i32 = arith.constant 0 : i32
    %c0_i32_0 = arith.constant 0 : i32
    %c0_i32_1 = arith.constant 0 : i32
    return %c0_i32, %c0_i32_0 : i32, i32
  }
  func.func @transform_4(%arg0: i32) -> (i32, i32) {
    %c0_i32 = arith.constant 0 : i32
    %c0_i32_0 = arith.constant 0 : i32
    %c0_i32_1 = arith.constant 0 : i32
    return %c0_i32, %c0_i32_0 : i32, i32
  }
  func.func @transform_5(%arg0: i32) -> (i32, i32, i32) {
    %c0_i32 = arith.constant 0 : i32
    %c0_i32_0 = arith.constant 0 : i32
    %c0_i32_1 = arith.constant 0 : i32
    return %arg0, %c0_i32, %c0_i32_0 : i32, i32, i32
  }
  func.func @transform_6(%arg0: i32) -> (i32, i32, i32) {
    %c0_i32 = arith.constant 0 : i32
    %c0_i32_0 = arith.constant 0 : i32
    %c0_i32_1 = arith.constant 0 : i32
    return %arg0, %c0_i32, %c0_i32_0 : i32, i32, i32
  }
  func.func @transform_7(%arg0: i32) -> (i32, i32, i32) {
    %c0_i32 = arith.constant 0 : i32
    %c0_i32_0 = arith.constant 0 : i32
    %c0_i32_1 = arith.constant 0 : i32
    return %arg0, %c0_i32, %c0_i32_0 : i32, i32, i32
  }
}

module attributes {stable_mosaic.version = 11 : i64} {
  func.func @kernel(%arg0: i32, %arg1: memref<1x8x288xf32, #tpu.memory_space<vmem>>, %arg2: memref<8x1xf32, #tpu.memory_space<vmem>>, %arg3: memref<8x1xf32, #tpu.memory_space<vmem>>, %arg4: memref<1x8x288xf32, #tpu.memory_space<vmem>>) attributes {dimension_semantics = [#tpu.dimension_semantics<parallel>], iteration_bounds = array<i64: 2>, scalar_prefetch = 0 : i64, scratch_operands = 0 : i64, tpu.core_type = #tpu.core_type<tc>, window_params = [{transform_indices = @transform_0, window_bounds = array<i64: 1, 8, 288>}, {pipeline_mode = #tpu.pipeline_mode<synchronous>, transform_indices = @transform_1, window_bounds = array<i64: 8, 1>}, {pipeline_mode = #tpu.pipeline_mode<synchronous>, transform_indices = @transform_2, window_bounds = array<i64: 8, 1>}, {transform_indices = @transform_3, window_bounds = array<i64: 1, 8, 288>}]} {
    %c0 = arith.constant 0 : index
    %c0_0 = arith.constant 0 : index
    %c0_1 = arith.constant 0 : index
    %0 = vector.load %arg1[%c0, %c0_0, %c0_1] : memref<1x8x288xf32, #tpu.memory_space<vmem>>, vector<1x8x288xf32>
    %1 = vector.shape_cast %0 : vector<1x8x288xf32> to vector<8x288xf32>
    %c0_2 = arith.constant 0 : index
    %c0_3 = arith.constant 0 : index
    %2 = vector.load %arg2[%c0_2, %c0_3] : memref<8x1xf32, #tpu.memory_space<vmem>>, vector<8x1xf32>
    %3 = vector.broadcast %2 : vector<8x1xf32> to vector<8x288xf32>
    %4 = arith.mulf %1, %3 : vector<8x288xf32>
    %c0_4 = arith.constant 0 : index
    %c0_5 = arith.constant 0 : index
    %5 = vector.load %arg3[%c0_4, %c0_5] : memref<8x1xf32, #tpu.memory_space<vmem>>, vector<8x1xf32>
    %6 = vector.broadcast %5 : vector<8x1xf32> to vector<8x288xf32>
    %7 = arith.addf %4, %6 : vector<8x288xf32>
    %cst = arith.constant 0.000000e+00 : f32
    %8 = vector.broadcast %cst : f32 to vector<8x288xf32>
    %9 = arith.maximumf %7, %8 : vector<8x288xf32>
    %10 = vector.shape_cast %9 : vector<8x288xf32> to vector<1x8x288xf32>
    %c0_6 = arith.constant 0 : index
    %c0_7 = arith.constant 0 : index
    %c0_8 = arith.constant 0 : index
    %11 = vector.load %arg4[%c0_6, %c0_7, %c0_8] : memref<1x8x288xf32, #tpu.memory_space<vmem>>, vector<1x8x288xf32>
    tpu.vector_store %arg4[%c0_6, %c0_7, %c0_8], %10 {strides = array<i32>} : memref<1x8x288xf32, #tpu.memory_space<vmem>>, vector<1x8x288xf32>,
    return
  }
  func.func @transform_0(%arg0: i32) -> (i32, i32, i32) {
    %c0_i32 = arith.constant 0 : i32
    %c0_i32_0 = arith.constant 0 : i32
    %c0_i32_1 = arith.constant 0 : i32
    return %arg0, %c0_i32, %c0_i32_0 : i32, i32, i32
  }
  func.func @transform_1(%arg0: i32) -> (i32, i32) {
    %c0_i32 = arith.constant 0 : i32
    %c0_i32_0 = arith.constant 0 : i32
    %c0_i32_1 = arith.constant 0 : i32
    return %c0_i32, %c0_i32_0 : i32, i32
  }
  func.func @transform_2(%arg0: i32) -> (i32, i32) {
    %c0_i32 = arith.constant 0 : i32
    %c0_i32_0 = arith.constant 0 : i32
    %c0_i32_1 = arith.constant 0 : i32
    return %c0_i32, %c0_i32_0 : i32, i32
  }
  func.func @transform_3(%arg0: i32) -> (i32, i32, i32) {
    %c0_i32 = arith.constant 0 : i32
    %c0_i32_0 = arith.constant 0 : i32
    %c0_i32_1 = arith.constant 0 : i32
    return %arg0, %c0_i32, %c0_i32_0 : i32, i32, i32
  }
}

module attributes {stable_mosaic.version = 11 : i64} {
  func.func @kernel(%arg0: i32, %arg1: memref<1x8x326xf32, #tpu.memory_space<vmem>>, %arg2: memref<8x1xf32, #tpu.memory_space<vmem>>, %arg3: memref<8x1xf32, #tpu.memory_space<vmem>>, %arg4: memref<8x72xbf16, #tpu.memory_space<vmem>>, %arg5: memref<8x1xf32, #tpu.memory_space<vmem>>, %arg6: memref<1x326xf32, #tpu.memory_space<vmem>>, %arg7: memref<1x288xf32, #tpu.memory_space<vmem>>, %arg8: memref<1x8x288xf32, #tpu.memory_space<vmem>>, %arg9: memref<1x1x8xf32, #tpu.memory_space<vmem>>, %arg10: memref<1x1x8xf32, #tpu.memory_space<vmem>>) attributes {dimension_semantics = [#tpu.dimension_semantics<parallel>], iteration_bounds = array<i64: 2>, scalar_prefetch = 0 : i64, scratch_operands = 0 : i64, tpu.core_type = #tpu.core_type<tc>, window_params = [{transform_indices = @transform_0, window_bounds = array<i64: 1, 8, 326>}, {pipeline_mode = #tpu.pipeline_mode<synchronous>, transform_indices = @transform_1, window_bounds = array<i64: 8, 1>}, {pipeline_mode = #tpu.pipeline_mode<synchronous>, transform_indices = @transform_2, window_bounds = array<i64: 8, 1>}, {pipeline_mode = #tpu.pipeline_mode<synchronous>, transform_indices = @transform_3, window_bounds = array<i64: 8, 72>}, {pipeline_mode = #tpu.pipeline_mode<synchronous>, transform_indices = @transform_4, window_bounds = array<i64: 8, 1>}, {pipeline_mode = #tpu.pipeline_mode<synchronous>, transform_indices = @transform_5, window_bounds = array<i64: 1, 326>}, {pipeline_mode = #tpu.pipeline_mode<synchronous>, transform_indices = @transform_6, window_bounds = array<i64: 1, 288>}, {transform_indices = @transform_7, window_bounds = array<i64: 1, 8, 288>}, {transform_indices = @transform_8, window_bounds = array<i64: 1, 1, 8>}, {transform_indices = @transform_9, window_bounds = array<i64: 1, 1, 8>}]} {
    %c0 = arith.constant 0 : index
    %c0_0 = arith.constant 0 : index
    %c0_1 = arith.constant 0 : index
    %0 = vector.load %arg1[%c0, %c0_0, %c0_1] : memref<1x8x326xf32, #tpu.memory_space<vmem>>, vector<1x8x326xf32>
    %1 = vector.shape_cast %0 : vector<1x8x326xf32> to vector<8x326xf32>
    %c0_2 = arith.constant 0 : index
    %c0_3 = arith.constant 0 : index
    %2 = vector.load %arg2[%c0_2, %c0_3] : memref<8x1xf32, #tpu.memory_space<vmem>>, vector<8x1xf32>
    %3 = vector.broadcast %2 : vector<8x1xf32> to vector<8x326xf32>
    %4 = arith.mulf %1, %3 : vector<8x326xf32>
    %c0_4 = arith.constant 0 : index
    %c0_5 = arith.constant 0 : index
    %5 = vector.load %arg3[%c0_4, %c0_5] : memref<8x1xf32, #tpu.memory_space<vmem>>, vector<8x1xf32>
    %6 = vector.broadcast %5 : vector<8x1xf32> to vector<8x326xf32>
    %7 = arith.addf %4, %6 : vector<8x326xf32>
    %cst = arith.constant 0.000000e+00 : f32
    %8 = vector.broadcast %cst : f32 to vector<8x326xf32>
    %9 = arith.maximumf %7, %8 : vector<8x326xf32>
    %c0_6 = arith.constant 0 : index
    %c0_7 = arith.constant 0 : index
    %10 = vector.load %arg6[%c0_6, %c0_7] : memref<1x326xf32, #tpu.memory_space<vmem>>, vector<1x326xf32>
    %11 = vector.broadcast %10 : vector<1x326xf32> to vector<8x326xf32>
    %12 = arith.mulf %9, %11 : vector<8x326xf32>
    %13 = arith.truncf %12 : vector<8x326xf32> to vector<8x326xbf16>
    %14 = vector.extract_strided_slice %13 {offsets = [0, 0], sizes = [8, 288], strides = [1, 1]} : vector<8x326xbf16> to vector<8x288xbf16>
    %15 = vector.extract_strided_slice %13 {offsets = [0, 1], sizes = [8, 288], strides = [1, 1]} : vector<8x326xbf16> to vector<8x288xbf16>
    %16 = vector.extract_strided_slice %13 {offsets = [0, 2], sizes = [8, 288], strides = [1, 1]} : vector<8x326xbf16> to vector<8x288xbf16>
    %17 = vector.extract_strided_slice %13 {offsets = [0, 18], sizes = [8, 288], strides = [1, 1]} : vector<8x326xbf16> to vector<8x288xbf16>
    %18 = vector.extract_strided_slice %13 {offsets = [0, 19], sizes = [8, 288], strides = [1, 1]} : vector<8x326xbf16> to vector<8x288xbf16>
    %19 = vector.extract_strided_slice %13 {offsets = [0, 20], sizes = [8, 288], strides = [1, 1]} : vector<8x326xbf16> to vector<8x288xbf16>
    %20 = vector.extract_strided_slice %13 {offsets = [0, 36], sizes = [8, 288], strides = [1, 1]} : vector<8x326xbf16> to vector<8x288xbf16>
    %21 = vector.extract_strided_slice %13 {offsets = [0, 37], sizes = [8, 288], strides = [1, 1]} : vector<8x326xbf16> to vector<8x288xbf16>
    %22 = vector.extract_strided_slice %13 {offsets = [0, 38], sizes = [8, 288], strides = [1, 1]} : vector<8x326xbf16> to vector<8x288xbf16>
    %23 = tpu.concatenate %14, %15, %16, %17, %18, %19, %20, %21, %22 in 0 : vector<8x288xbf16>, vector<8x288xbf16>, vector<8x288xbf16>, vector<8x288xbf16>, vector<8x288xbf16>, vector<8x288xbf16>, vector<8x288xbf16>, vector<8x288xbf16>, vector<8x288xbf16> -> vector<72x288xbf16>
    %c0_8 = arith.constant 0 : index
    %c0_9 = arith.constant 0 : index
    %24 = vector.load %arg4[%c0_8, %c0_9] : memref<8x72xbf16, #tpu.memory_space<vmem>>, vector<8x72xbf16>
    %cst_10 = arith.constant dense<0.000000e+00> : vector<8x288xf32>
    %25 = tpu.matmul %24, %23, %cst_10 {dimension_numbers = #tpu.dot_dimension_numbers<[1], [0], [0], [1], [0, 0, 1, 1], [], []>} : vector<8x72xbf16>, vector<72x288xbf16>, vector<8x288xf32> -> vector<8x288xf32>
    %c0_11 = arith.constant 0 : index
    %c0_12 = arith.constant 0 : index
    %26 = vector.load %arg5[%c0_11, %c0_12] : memref<8x1xf32, #tpu.memory_space<vmem>>, vector<8x1xf32>
    %27 = vector.broadcast %26 : vector<8x1xf32> to vector<8x288xf32>
    %28 = arith.addf %25, %27 : vector<8x288xf32>
    %c0_13 = arith.constant 0 : index
    %c0_14 = arith.constant 0 : index
    %29 = vector.load %arg7[%c0_13, %c0_14] : memref<1x288xf32, #tpu.memory_space<vmem>>, vector<1x288xf32>
    %30 = vector.broadcast %29 : vector<1x288xf32> to vector<8x288xf32>
    %31 = arith.mulf %28, %30 : vector<8x288xf32>
    %cst_15 = arith.constant dense<0.000000e+00> : vector<8xf32>
    %32 = vector.multi_reduction <add>, %31, %cst_15 [1] : vector<8x288xf32> to vector<8xf32>
    %33 = vector.shape_cast %32 : vector<8xf32> to vector<1x1x8xf32>
    %c0_16 = arith.constant 0 : index
    %c0_17 = arith.constant 0 : index
    %c0_18 = arith.constant 0 : index
    %34 = vector.load %arg9[%c0_16, %c0_17, %c0_18] : memref<1x1x8xf32, #tpu.memory_space<vmem>>, vector<1x1x8xf32>
    tpu.vector_store %arg9[%c0_16, %c0_17, %c0_18], %33 {strides = array<i32>} : memref<1x1x8xf32, #tpu.memory_space<vmem>>, vector<1x1x8xf32>,
    %35 = arith.mulf %31, %31 : vector<8x288xf32>
    %cst_19 = arith.constant dense<0.000000e+00> : vector<8xf32>
    %36 = vector.multi_reduction <add>, %35, %cst_19 [1] : vector<8x288xf32> to vector<8xf32>
    %37 = vector.shape_cast %36 : vector<8xf32> to vector<1x1x8xf32>
    %c0_20 = arith.constant 0 : index
    %c0_21 = arith.constant 0 : index
    %c0_22 = arith.constant 0 : index
    %38 = vector.load %arg10[%c0_20, %c0_21, %c0_22] : memref<1x1x8xf32, #tpu.memory_space<vmem>>, vector<1x1x8xf32>
    tpu.vector_store %arg10[%c0_20, %c0_21, %c0_22], %37 {strides = array<i32>} : memref<1x1x8xf32, #tpu.memory_space<vmem>>, vector<1x1x8xf32>,
    %39 = vector.shape_cast %31 : vector<8x288xf32> to vector<1x8x288xf32>
    %c0_23 = arith.constant 0 : index
    %c0_24 = arith.constant 0 : index
    %c0_25 = arith.constant 0 : index
    %40 = vector.load %arg8[%c0_23, %c0_24, %c0_25] : memref<1x8x288xf32, #tpu.memory_space<vmem>>, vector<1x8x288xf32>
    tpu.vector_store %arg8[%c0_23, %c0_24, %c0_25], %39 {strides = array<i32>} : memref<1x8x288xf32, #tpu.memory_space<vmem>>, vector<1x8x288xf32>,
    return
  }
  func.func @transform_0(%arg0: i32) -> (i32, i32, i32) {
    %c0_i32 = arith.constant 0 : i32
    %c0_i32_0 = arith.constant 0 : i32
    %c0_i32_1 = arith.constant 0 : i32
    return %arg0, %c0_i32, %c0_i32_0 : i32, i32, i32
  }
  func.func @transform_1(%arg0: i32) -> (i32, i32) {
    %c0_i32 = arith.constant 0 : i32
    %c0_i32_0 = arith.constant 0 : i32
    %c0_i32_1 = arith.constant 0 : i32
    return %c0_i32, %c0_i32_0 : i32, i32
  }
  func.func @transform_2(%arg0: i32) -> (i32, i32) {
    %c0_i32 = arith.constant 0 : i32
    %c0_i32_0 = arith.constant 0 : i32
    %c0_i32_1 = arith.constant 0 : i32
    return %c0_i32, %c0_i32_0 : i32, i32
  }
  func.func @transform_3(%arg0: i32) -> (i32, i32) {
    %c0_i32 = arith.constant 0 : i32
    %c0_i32_0 = arith.constant 0 : i32
    %c0_i32_1 = arith.constant 0 : i32
    return %c0_i32, %c0_i32_0 : i32, i32
  }
  func.func @transform_4(%arg0: i32) -> (i32, i32) {
    %c0_i32 = arith.constant 0 : i32
    %c0_i32_0 = arith.constant 0 : i32
    %c0_i32_1 = arith.constant 0 : i32
    return %c0_i32, %c0_i32_0 : i32, i32
  }
  func.func @transform_5(%arg0: i32) -> (i32, i32) {
    %c0_i32 = arith.constant 0 : i32
    %c0_i32_0 = arith.constant 0 : i32
    %c0_i32_1 = arith.constant 0 : i32
    return %c0_i32, %c0_i32_0 : i32, i32
  }
  func.func @transform_6(%arg0: i32) -> (i32, i32) {
    %c0_i32 = arith.constant 0 : i32
    %c0_i32_0 = arith.constant 0 : i32
    %c0_i32_1 = arith.constant 0 : i32
    return %c0_i32, %c0_i32_0 : i32, i32
  }
  func.func @transform_7(%arg0: i32) -> (i32, i32, i32) {
    %c0_i32 = arith.constant 0 : i32
    %c0_i32_0 = arith.constant 0 : i32
    %c0_i32_1 = arith.constant 0 : i32
    return %arg0, %c0_i32, %c0_i32_0 : i32, i32, i32
  }
  func.func @transform_8(%arg0: i32) -> (i32, i32, i32) {
    %c0_i32 = arith.constant 0 : i32
    %c0_i32_0 = arith.constant 0 : i32
    %c0_i32_1 = arith.constant 0 : i32
    return %arg0, %c0_i32, %c0_i32_0 : i32, i32, i32
  }
  func.func @transform_9(%arg0: i32) -> (i32, i32, i32) {
    %c0_i32 = arith.constant 0 : i32
    %c0_i32_0 = arith.constant 0 : i32
    %c0_i32_1 = arith.constant 0 : i32
    return %arg0, %c0_i32, %c0_i32_0 : i32, i32, i32
  }
}

</mosaic_0001>

<llo_original>
// kernel: up_forward.5
$region0: #{up_forward.5}
  #allocation0 [shape = 'u32[]', space=smem, size = 0x4, offset = 0x4, fixed_abs, tag = 'smem constant byte address 0x4 - core index']
  #allocation1 [shape = 'u32[144,128]{1,0:T(1,128)}', space=vmem, size = 0x12000, scoped, tag = 'internal scratch']
  %s0 = inlined_call_operand.vmem [shape: f32[2,8,288], index: 0, kind: input, shape index: {}]
  %s1 = inlined_call_operand.vmem [shape: f32[8,1], index: 1, kind: input, shape index: {}]
  %s2 = inlined_call_operand.vmem [shape: f32[8,1], index: 2, kind: input, shape index: {}]
  %s3 = inlined_call_operand.vmem [shape: f32[2,8,288], index: 3, kind: output, shape index: {}]
  %s4 = sld [smem:[#allocation0]]
  $region45: #{up_forward.5} parent=0
    _
  %s6 = ssub.s32 1, %s4
  %s7 = scalar_select 0, %s6, %s4
  loop: start=0, step=1, limit=4
  $region2: #{up_forward.5} parent=0 // loop_pre_header
    _
  $region3: #{up_forward.5} parent=0 // loop_header
    %s9 = sphi 0, %s13
    %p10 = scmp.ge.s32.totalorder %s9, 4
    %s19 = sphi 0, %s21
    %s22 = sphi 0, %s19
    %s23 = sphi 0, %s22
    %s39 = sphi 0, %s23
    %s43 = sphi 0, %s43
    %s45 = sphi 0, %s43
    %s46 = sphi 0, %s45
    %s60 = sphi 0, %s46
    %s64 = sphi 0, %s64
    %s66 = sphi 0, %s64
    %s67 = sphi 0, %s66
    %s81 = sphi 0, %s67
    %s87 = sphi 0, %s89
    %s90 = sphi 0, %s87
    %s91 = sphi 0, %s90
    %s107 = sphi 0, %s91
  $region4: #{up_forward.5} parent=0 // loop_header_branch
    %12 = sbr.rel (%p10) target = $region8
  $region5: #{up_forward.5} parent=0 // loop_body
    %s14 = ssub.s32 %s9, 1
    %s15 = ssub.s32 %s9, 2
    %s16 = sadd.s32 %s9, 1
    %s17 = ssub.s32 %s9, %s16
    %p18 = scmp.eq.s32.totalorder %s17, 0
    %s20 = sadd.s32 %s19, 1
    %s21 = scalar_select %p18, %s19, %s20
    %p24 = pneg %p18
    %p25 = scmp.eq.s32.totalorder %s9, 1
    %p26 = por %p24, %p25
    %p27 = scmp.ne.s32.totalorder %s19, %s22
    %p28 = scmp.eq.s32.totalorder %s9, 0
    %p29 = por %p27, %p28
    %p30 = scmp.ne.s32.totalorder %s19, %s22
    %p31 = scmp.eq.s32.totalorder %s14, 1
    %p32 = por %p30, %p31
    %p33 = scmp.ne.s32.totalorder %s22, %s23
    %p34 = scmp.eq.s32.totalorder %s14, 0
    %p35 = por %p33, %p34
    %p36 = scmp.ne.s32.totalorder %s22, %s23
    %p37 = scmp.eq.s32.totalorder %s15, 1
    %p38 = por %p36, %p37
    %p40 = scmp.ne.s32.totalorder %s23, %s39
    %p41 = scmp.eq.s32.totalorder %s15, 0
    %p42 = por %p40, %p41
    %s44 = sadd.s32 %s43, 1
    %p47 = scmp.eq.s32.totalorder %s9, 1
    %p48 = scmp.ne.s32.totalorder %s43, %s45
    %p49 = scmp.eq.s32.totalorder %s9, 0
    %p50 = por %p48, %p49
    %p51 = scmp.ne.s32.totalorder %s43, %s45
    %p52 = scmp.eq.s32.totalorder %s14, 1
    %p53 = por %p51, %p52
    %p54 = scmp.ne.s32.totalorder %s45, %s46
    %p55 = scmp.eq.s32.totalorder %s14, 0
    %p56 = por %p54, %p55
    %p57 = scmp.ne.s32.totalorder %s45, %s46
    %p58 = scmp.eq.s32.totalorder %s15, 1
    %p59 = por %p57, %p58
    %p61 = scmp.ne.s32.totalorder %s46, %s60
    %p62 = scmp.eq.s32.totalorder %s15, 0
    %p63 = por %p61, %p62
    %s65 = sadd.s32 %s64, 1
    %p68 = scmp.eq.s32.totalorder %s9, 1
    %p69 = scmp.ne.s32.totalorder %s64, %s66
    %p70 = scmp.eq.s32.totalorder %s9, 0
    %p71 = por %p69, %p70
    %p72 = scmp.ne.s32.totalorder %s64, %s66
    %p73 = scmp.eq.s32.totalorder %s14, 1
    %p74 = por %p72, %p73
    %p75 = scmp.ne.s32.totalorder %s66, %s67
    %p76 = scmp.eq.s32.totalorder %s14, 0
    %p77 = por %p75, %p76
    %p78 = scmp.ne.s32.totalorder %s66, %s67
    %p79 = scmp.eq.s32.totalorder %s15, 1
    %p80 = por %p78, %p79
    %p82 = scmp.ne.s32.totalorder %s67, %s81
    %p83 = scmp.eq.s32.totalorder %s15, 0
    %p84 = por %p82, %p83
    %s85 = ssub.s32 %s9, %s16
    %p86 = scmp.eq.s32.totalorder %s85, 0
    %s88 = sadd.s32 %s87, 1
    %s89 = scalar_select %p86, %s87, %s88
    %p92 = pneg %p86
    %p93 = scmp.eq.s32.totalorder %s9, 1
    %p94 = por %p92, %p93
    %p95 = scmp.ne.s32.totalorder %s87, %s90
    %p96 = scmp.eq.s32.totalorder %s9, 0
    %p97 = por %p95, %p96
    %p98 = scmp.ne.s32.totalorder %s87, %s90
    %p99 = scmp.eq.s32.totalorder %s14, 1
    %p100 = por %p98, %p99
    %p101 = scmp.ne.s32.totalorder %s90, %s91
    %p102 = scmp.eq.s32.totalorder %s14, 0
    %p103 = por %p101, %p102
    %p104 = scmp.ne.s32.totalorder %s90, %s91
    %p105 = scmp.eq.s32.totalorder %s15, 1
    %p106 = por %p104, %p105
    %p108 = scmp.ne.s32.totalorder %s91, %s107
    %p109 = scmp.eq.s32.totalorder %s15, 0
    %p110 = por %p108, %p109
    %p111 = scmp.le.s32.totalorder 1, %s9
    %p112 = scmp.lt.s32.totalorder %s9, 3
    %p113 = pnand %p111, %p112
    %p114 = pneg %p113
    // Predicated region
    $region9: #{up_forward.5} parent=5 // pred_check
      _
    $region10: #{up_forward.5} parent=5 // pred_check_branch
      %116 = sbr.rel (%p113) target = $region12
    $region11: #{up_forward.5} parent=5 // pred_region
      %s117 = ssub.s32 %s9, 1
      // Predicated region
      $region13: #{up_forward.5} parent=11 // pred_check
        %p118 = pneg %p56
      $region14: #{up_forward.5} parent=11 // pred_check_branch
        %120 = sbr.rel (%p118) target = $region16
      $region15: #{up_forward.5} parent=11 // pred_region
        _
      $region16: #{up_forward.5} parent=11 // pred_fallthru
        _
      // Predicated region
      $region17: #{up_forward.5} parent=11 // pred_check
        %p121 = pneg %p77
      $region18: #{up_forward.5} parent=11 // pred_check_branch
        %123 = sbr.rel (%p121) target = $region20
      $region19: #{up_forward.5} parent=11 // pred_region
        _
      $region20: #{up_forward.5} parent=11 // pred_fallthru
        _
    $region12: #{up_forward.5} parent=5 // pred_fallthru
      _
    %p124 = scmp.lt.s32.totalorder %s9, 2
    // Predicated region
    $region21: #{up_forward.5} parent=5 // pred_check
      %p125 = pneg %p124
    $region22: #{up_forward.5} parent=5 // pred_check_branch
      %127 = sbr.rel (%p125) target = $region24
    $region23: #{up_forward.5} parent=5 // pred_region
      // Predicated region
      $region25: #{up_forward.5} parent=23 // pred_check
        %p128 = pneg %p29
      $region26: #{up_forward.5} parent=23 // pred_check_branch
        %130 = sbr.rel (%p128) target = $region28
      $region27: #{up_forward.5} parent=23 // pred_region
        %p131 = scmp.lt.s32.totalorder %s9, 1
        %s132 = scalar_select %p131, %s9, 1
        %s133 = smul.addr %s132, 3
        %s134 = smul.addr %s133, 8
        %s135 = scalar_lea.vmem %s0, %s134
      $region28: #{up_forward.5} parent=23 // pred_fallthru
        _
    $region24: #{up_forward.5} parent=5 // pred_fallthru
      _
    %p136 = scmp.le.s32.totalorder 1, %s9
    %p137 = scmp.lt.s32.totalorder %s9, 3
    %p138 = pnand %p136, %p137
    %p139 = pneg %p138
    // Predicated region
    $region29: #{up_forward.5} parent=5 // pred_check
      _
    $region30: #{up_forward.5} parent=5 // pred_check_branch
      %141 = sbr.rel (%p138) target = $region32
    $region31: #{up_forward.5} parent=5 // pred_region
      %s142 = ssub.s32 %s9, 1
      %p143 = scmp.lt.s32.totalorder %s14, 1
      %s144 = scalar_select %p143, %s14, 1
      %s145 = smul.addr %s144, 3
      %s146 = smul.addr %s145, 8
      %s147 = scalar_lea.vmem %s0, %s146
      %p148 = pneg %p35
      %p149 = pneg %p32
      %p150 = pneg %p56
      %p151 = pneg %p53
      %p152 = pneg %p77
      %p153 = pneg %p74
      %p154 = pneg %p103
      %p155 = pneg %p100
      %p156 = scmp.lt.s32.totalorder %s14, 1
      %s157 = scalar_select %p156, %s14, 1
      %s158 = smul.addr %s157, 3
      %s159 = smul.addr %s158, 8
      %s160 = scalar_lea.vmem %s3, %s159
      %p161 = scmp.lt.s32.totalorder %s14, 1
      %s162 = scalar_select %p161, %s14, 1
      %s163 = smul.addr %s162, 3
      %s164 = smul.addr %s163, 8
      %s165 = scalar_lea.vmem %s0, %s164
      %p166 = scmp.lt.s32.totalorder %s14, 1
      %s167 = scalar_select %p166, %s14, 1
      %s168 = smul.addr %s167, 3
      %s169 = smul.addr %s168, 8
      %s170 = scalar_lea.vmem %s3, %s169
      %v171 = vld [vmem:[%s165] sm:$0xff]
      %v172 = vld [vmem:[%s165 + $0x8] sm:$0xff]
      %v173 = vld [vmem:[%s165 + $0x10] sm:$0xff]
      %v174 = vld [vmem:[%s1] sm:$0xff]
      %176 = vset.pattern.permute.xlu0 0
      %177 = vperm.xlu0 %176, %v174
      %v178 = vpop.permute.xlu0 %177
      %v180 = vmul.f32 %v171, %v178
      %v181 = vmul.f32 %v172, %v178
      %v182 = vmul.f32 %v173, %v178
      %v183 = vld [vmem:[%s2] sm:$0xff]
      %185 = vset.pattern.permute.xlu0 0
      %186 = vperm.xlu0 %185, %v183
      %v187 = vpop.permute.xlu0 %186
      %v189 = vadd.f32 %v180, %v187
      %v190 = vadd.f32 %v181, %v187
      %v191 = vadd.f32 %v182, %v187
      %v192 = vmax.f32 %v189, 0.0
      %v193 = vmax.f32 %v190, 0.0
      %v194 = vmax.f32 %v191, 0.0
      %195 = vst [vmem:[%s170] sm:$0xff] %v192
      %196 = vst [vmem:[%s170 + $0x8] sm:$0xff] %v193
      %vm197 = vcmask 261120
      %198 = vst.msk [vmem:[%s170 + $0x10] sm:$0xff] %vm197, %v194
      %p199 = scmp.lt.s32.totalorder %s14, 1
      %s200 = scalar_select %p199, %s14, 1
      %s201 = smul.addr %s200, 3
      %s202 = smul.addr %s201, 8
      %s203 = scalar_lea.vmem %s3, %s202
      // Predicated region
      $region33: #{up_forward.5} parent=31 // pred_check
        %p204 = pneg %p100
      $region34: #{up_forward.5} parent=31 // pred_check_branch
        %206 = sbr.rel (%p204) target = $region36
      $region35: #{up_forward.5} parent=31 // pred_region
        _
      $region36: #{up_forward.5} parent=31 // pred_fallthru
        _
    $region32: #{up_forward.5} parent=5 // pred_fallthru
      _
    %p207 = scmp.le.s32.totalorder 2, %s9
    // Predicated region
    $region37: #{up_forward.5} parent=5 // pred_check
      %p208 = pneg %p207
    $region38: #{up_forward.5} parent=5 // pred_check_branch
      %210 = sbr.rel (%p208) target = $region40
    $region39: #{up_forward.5} parent=5 // pred_region
      %s211 = ssub.s32 %s9, 2
      // Predicated region
      $region41: #{up_forward.5} parent=39 // pred_check
        %p212 = pneg %p106
      $region42: #{up_forward.5} parent=39 // pred_check_branch
        %214 = sbr.rel (%p212) target = $region44
      $region43: #{up_forward.5} parent=39 // pred_region
        %p215 = scmp.lt.s32.totalorder %s15, 1
        %s216 = scalar_select %p215, %s15, 1
        %s217 = smul.addr %s216, 3
        %s218 = smul.addr %s217, 8
        %s219 = scalar_lea.vmem %s3, %s218
      $region44: #{up_forward.5} parent=39 // pred_fallthru
        _
    $region40: #{up_forward.5} parent=5 // pred_fallthru
      _
  $region6: #{up_forward.5} parent=0 // loop_footer
    %s13 = sadd.s32 1, %s9
  $region7: #{up_forward.5} parent=0 // loop_footer_branch
    %8 = sbr.rel target = $region3
  $region8: #{up_forward.5} parent=0 // loop_exit
    _

// kernel: up_forward.4
$region0: #{up_forward.4}
  #allocation0 [shape = 'u32[]', space=smem, size = 0x4, offset = 0x4, fixed_abs, tag = 'smem constant byte address 0x4 - core index']
  #allocation1 [shape = 'u32[144,128]{1,0:T(1,128)}', space=vmem, size = 0x12000, scoped, tag = 'internal scratch']
  %s0 = inlined_call_operand.vmem [shape: f32[2,8,326], index: 0, kind: input, shape index: {}]
  %s1 = inlined_call_operand.vmem [shape: f32[8,1], index: 1, kind: input, shape index: {}]
  %s2 = inlined_call_operand.vmem [shape: f32[8,1], index: 2, kind: input, shape index: {}]
  %s3 = inlined_call_operand.vmem [shape: bf16[8,72], index: 3, kind: input, shape index: {}]
  %s4 = inlined_call_operand.vmem [shape: f32[8,1], index: 4, kind: input, shape index: {}]
  %s5 = inlined_call_operand.vmem [shape: f32[1,326], index: 5, kind: input, shape index: {}]
  %s6 = inlined_call_operand.vmem [shape: f32[1,288], index: 6, kind: input, shape index: {}]
  %s7 = inlined_call_operand.vmem [shape: f32[2,8,288], index: 7, kind: output, shape index: {0}]
  %s8 = inlined_call_operand.vmem [shape: f32[2,1,8], index: 8, kind: output, shape index: {1}]
  %s9 = inlined_call_operand.vmem [shape: f32[2,1,8], index: 9, kind: output, shape index: {2}]
  %10 = xla_tuple %s7, %s8, %s9
  %s11 = sld [smem:[#allocation0]]
  $region77: #{up_forward.4} parent=0
    _
  %s13 = ssub.s32 1, %s11
  %s14 = scalar_select 0, %s13, %s11
  loop: start=0, step=1, limit=4
  $region2: #{up_forward.4} parent=0 // loop_pre_header
    _
  $region3: #{up_forward.4} parent=0 // loop_header
    %s16 = sphi 0, %s20
    %p17 = scmp.ge.s32.totalorder %s16, 4
    %s26 = sphi 0, %s28
    %s29 = sphi 0, %s26
    %s30 = sphi 0, %s29
    %s46 = sphi 0, %s30
    %s50 = sphi 0, %s50
    %s52 = sphi 0, %s50
    %s53 = sphi 0, %s52
    %s67 = sphi 0, %s53
    %s71 = sphi 0, %s71
    %s73 = sphi 0, %s71
    %s74 = sphi 0, %s73
    %s88 = sphi 0, %s74
    %s92 = sphi 0, %s92
    %s94 = sphi 0, %s92
    %s95 = sphi 0, %s94
    %s109 = sphi 0, %s95
    %s113 = sphi 0, %s113
    %s115 = sphi 0, %s113
    %s116 = sphi 0, %s115
    %s130 = sphi 0, %s116
    %s134 = sphi 0, %s134
    %s136 = sphi 0, %s134
    %s137 = sphi 0, %s136
    %s151 = sphi 0, %s137
    %s155 = sphi 0, %s155
    %s157 = sphi 0, %s155
    %s158 = sphi 0, %s157
    %s172 = sphi 0, %s158
    %s178 = sphi 0, %s180
    %s181 = sphi 0, %s178
    %s182 = sphi 0, %s181
    %s198 = sphi 0, %s182
    %s204 = sphi 0, %s206
    %s207 = sphi 0, %s204
    %s208 = sphi 0, %s207
    %s224 = sphi 0, %s208
    %s230 = sphi 0, %s232
    %s233 = sphi 0, %s230
    %s234 = sphi 0, %s233
    %s250 = sphi 0, %s234
  $region4: #{up_forward.4} parent=0 // loop_header_branch
    %19 = sbr.rel (%p17) target = $region8
  $region5: #{up_forward.4} parent=0 // loop_body
    %s21 = ssub.s32 %s16, 1
    %s22 = ssub.s32 %s16, 2
    %s23 = sadd.s32 %s16, 1
    %s24 = ssub.s32 %s16, %s23
    %p25 = scmp.eq.s32.totalorder %s24, 0
    %s27 = sadd.s32 %s26, 1
    %s28 = scalar_select %p25, %s26, %s27
    %p31 = pneg %p25
    %p32 = scmp.eq.s32.totalorder %s16, 1
    %p33 = por %p31, %p32
    %p34 = scmp.ne.s32.totalorder %s26, %s29
    %p35 = scmp.eq.s32.totalorder %s16, 0
    %p36 = por %p34, %p35
    %p37 = scmp.ne.s32.totalorder %s26, %s29
    %p38 = scmp.eq.s32.totalorder %s21, 1
    %p39 = por %p37, %p38
    %p40 = scmp.ne.s32.totalorder %s29, %s30
    %p41 = scmp.eq.s32.totalorder %s21, 0
    %p42 = por %p40, %p41
    %p43 = scmp.ne.s32.totalorder %s29, %s30
    %p44 = scmp.eq.s32.totalorder %s22, 1
    %p45 = por %p43, %p44
    %p47 = scmp.ne.s32.totalorder %s30, %s46
    %p48 = scmp.eq.s32.totalorder %s22, 0
    %p49 = por %p47, %p48
    %s51 = sadd.s32 %s50, 1
    %p54 = scmp.eq.s32.totalorder %s16, 1
    %p55 = scmp.ne.s32.totalorder %s50, %s52
    %p56 = scmp.eq.s32.totalorder %s16, 0
    %p57 = por %p55, %p56
    %p58 = scmp.ne.s32.totalorder %s50, %s52
    %p59 = scmp.eq.s32.totalorder %s21, 1
    %p60 = por %p58, %p59
    %p61 = scmp.ne.s32.totalorder %s52, %s53
    %p62 = scmp.eq.s32.totalorder %s21, 0
    %p63 = por %p61, %p62
    %p64 = scmp.ne.s32.totalorder %s52, %s53
    %p65 = scmp.eq.s32.totalorder %s22, 1
    %p66 = por %p64, %p65
    %p68 = scmp.ne.s32.totalorder %s53, %s67
    %p69 = scmp.eq.s32.totalorder %s22, 0
    %p70 = por %p68, %p69
    %s72 = sadd.s32 %s71, 1
    %p75 = scmp.eq.s32.totalorder %s16, 1
    %p76 = scmp.ne.s32.totalorder %s71, %s73
    %p77 = scmp.eq.s32.totalorder %s16, 0
    %p78 = por %p76, %p77
    %p79 = scmp.ne.s32.totalorder %s71, %s73
    %p80 = scmp.eq.s32.totalorder %s21, 1
    %p81 = por %p79, %p80
    %p82 = scmp.ne.s32.totalorder %s73, %s74
    %p83 = scmp.eq.s32.totalorder %s21, 0
    %p84 = por %p82, %p83
    %p85 = scmp.ne.s32.totalorder %s73, %s74
    %p86 = scmp.eq.s32.totalorder %s22, 1
    %p87 = por %p85, %p86
    %p89 = scmp.ne.s32.totalorder %s74, %s88
    %p90 = scmp.eq.s32.totalorder %s22, 0
    %p91 = por %p89, %p90
    %s93 = sadd.s32 %s92, 1
    %p96 = scmp.eq.s32.totalorder %s16, 1
    %p97 = scmp.ne.s32.totalorder %s92, %s94
    %p98 = scmp.eq.s32.totalorder %s16, 0
    %p99 = por %p97, %p98
    %p100 = scmp.ne.s32.totalorder %s92, %s94
    %p101 = scmp.eq.s32.totalorder %s21, 1
    %p102 = por %p100, %p101
    %p103 = scmp.ne.s32.totalorder %s94, %s95
    %p104 = scmp.eq.s32.totalorder %s21, 0
    %p105 = por %p103, %p104
    %p106 = scmp.ne.s32.totalorder %s94, %s95
    %p107 = scmp.eq.s32.totalorder %s22, 1
    %p108 = por %p106, %p107
    %p110 = scmp.ne.s32.totalorder %s95, %s109
    %p111 = scmp.eq.s32.totalorder %s22, 0
    %p112 = por %p110, %p111
    %s114 = sadd.s32 %s113, 1
    %p117 = scmp.eq.s32.totalorder %s16, 1
    %p118 = scmp.ne.s32.totalorder %s113, %s115
    %p119 = scmp.eq.s32.totalorder %s16, 0
    %p120 = por %p118, %p119
    %p121 = scmp.ne.s32.totalorder %s113, %s115
    %p122 = scmp.eq.s32.totalorder %s21, 1
    %p123 = por %p121, %p122
    %p124 = scmp.ne.s32.totalorder %s115, %s116
    %p125 = scmp.eq.s32.totalorder %s21, 0
    %p126 = por %p124, %p125
    %p127 = scmp.ne.s32.totalorder %s115, %s116
    %p128 = scmp.eq.s32.totalorder %s22, 1
    %p129 = por %p127, %p128
    %p131 = scmp.ne.s32.totalorder %s116, %s130
    %p132 = scmp.eq.s32.totalorder %s22, 0
    %p133 = por %p131, %p132
    %s135 = sadd.s32 %s134, 1
    %p138 = scmp.eq.s32.totalorder %s16, 1
    %p139 = scmp.ne.s32.totalorder %s134, %s136
    %p140 = scmp.eq.s32.totalorder %s16, 0
    %p141 = por %p139, %p140
    %p142 = scmp.ne.s32.totalorder %s134, %s136
    %p143 = scmp.eq.s32.totalorder %s21, 1
    %p144 = por %p142, %p143
    %p145 = scmp.ne.s32.totalorder %s136, %s137
    %p146 = scmp.eq.s32.totalorder %s21, 0
    %p147 = por %p145, %p146
    %p148 = scmp.ne.s32.totalorder %s136, %s137
    %p149 = scmp.eq.s32.totalorder %s22, 1
    %p150 = por %p148, %p149
    %p152 = scmp.ne.s32.totalorder %s137, %s151
    %p153 = scmp.eq.s32.totalorder %s22, 0
    %p154 = por %p152, %p153
    %s156 = sadd.s32 %s155, 1
    %p159 = scmp.eq.s32.totalorder %s16, 1
    %p160 = scmp.ne.s32.totalorder %s155, %s157
    %p161 = scmp.eq.s32.totalorder %s16, 0
    %p162 = por %p160, %p161
    %p163 = scmp.ne.s32.totalorder %s155, %s157
    %p164 = scmp.eq.s32.totalorder %s21, 1
    %p165 = por %p163, %p164
    %p166 = scmp.ne.s32.totalorder %s157, %s158
    %p167 = scmp.eq.s32.totalorder %s21, 0
    %p168 = por %p166, %p167
    %p169 = scmp.ne.s32.totalorder %s157, %s158
    %p170 = scmp.eq.s32.totalorder %s22, 1
    %p171 = por %p169, %p170
    %p173 = scmp.ne.s32.totalorder %s158, %s172
    %p174 = scmp.eq.s32.totalorder %s22, 0
    %p175 = por %p173, %p174
    %s176 = ssub.s32 %s16, %s23
    %p177 = scmp.eq.s32.totalorder %s176, 0
    %s179 = sadd.s32 %s178, 1
    %s180 = scalar_select %p177, %s178, %s179
    %p183 = pneg %p177
    %p184 = scmp.eq.s32.totalorder %s16, 1
    %p185 = por %p183, %p184
    %p186 = scmp.ne.s32.totalorder %s178, %s181
    %p187 = scmp.eq.s32.totalorder %s16, 0
    %p188 = por %p186, %p187
    %p189 = scmp.ne.s32.totalorder %s178, %s181
    %p190 = scmp.eq.s32.totalorder %s21, 1
    %p191 = por %p189, %p190
    %p192 = scmp.ne.s32.totalorder %s181, %s182
    %p193 = scmp.eq.s32.totalorder %s21, 0
    %p194 = por %p192, %p193
    %p195 = scmp.ne.s32.totalorder %s181, %s182
    %p196 = scmp.eq.s32.totalorder %s22, 1
    %p197 = por %p195, %p196
    %p199 = scmp.ne.s32.totalorder %s182, %s198
    %p200 = scmp.eq.s32.totalorder %s22, 0
    %p201 = por %p199, %p200
    %s202 = ssub.s32 %s16, %s23
    %p203 = scmp.eq.s32.totalorder %s202, 0
    %s205 = sadd.s32 %s204, 1
    %s206 = scalar_select %p203, %s204, %s205
    %p209 = pneg %p203
    %p210 = scmp.eq.s32.totalorder %s16, 1
    %p211 = por %p209, %p210
    %p212 = scmp.ne.s32.totalorder %s204, %s207
    %p213 = scmp.eq.s32.totalorder %s16, 0
    %p214 = por %p212, %p213
    %p215 = scmp.ne.s32.totalorder %s204, %s207
    %p216 = scmp.eq.s32.totalorder %s21, 1
    %p217 = por %p215, %p216
    %p218 = scmp.ne.s32.totalorder %s207, %s208
    %p219 = scmp.eq.s32.totalorder %s21, 0
    %p220 = por %p218, %p219
    %p221 = scmp.ne.s32.totalorder %s207, %s208
    %p222 = scmp.eq.s32.totalorder %s22, 1
    %p223 = por %p221, %p222
    %p225 = scmp.ne.s32.totalorder %s208, %s224
    %p226 = scmp.eq.s32.totalorder %s22, 0
    %p227 = por %p225, %p226
    %s228 = ssub.s32 %s16, %s23
    %p229 = scmp.eq.s32.totalorder %s228, 0
    %s231 = sadd.s32 %s230, 1
    %s232 = scalar_select %p229, %s230, %s231
    %p235 = pneg %p229
    %p236 = scmp.eq.s32.totalorder %s16, 1
    %p237 = por %p235, %p236
    %p238 = scmp.ne.s32.totalorder %s230, %s233
    %p239 = scmp.eq.s32.totalorder %s16, 0
    %p240 = por %p238, %p239
    %p241 = scmp.ne.s32.totalorder %s230, %s233
    %p242 = scmp.eq.s32.totalorder %s21, 1
    %p243 = por %p241, %p242
    %p244 = scmp.ne.s32.totalorder %s233, %s234
    %p245 = scmp.eq.s32.totalorder %s21, 0
    %p246 = por %p244, %p245
    %p247 = scmp.ne.s32.totalorder %s233, %s234
    %p248 = scmp.eq.s32.totalorder %s22, 1
    %p249 = por %p247, %p248
    %p251 = scmp.ne.s32.totalorder %s234, %s250
    %p252 = scmp.eq.s32.totalorder %s22, 0
    %p253 = por %p251, %p252
    %p254 = scmp.le.s32.totalorder 1, %s16
    %p255 = scmp.lt.s32.totalorder %s16, 3
    %p256 = pnand %p254, %p255
    %p257 = pneg %p256
    // Predicated region
    $region9: #{up_forward.4} parent=5 // pred_check
      _
    $region10: #{up_forward.4} parent=5 // pred_check_branch
      %259 = sbr.rel (%p256) target = $region12
    $region11: #{up_forward.4} parent=5 // pred_region
      %s260 = ssub.s32 %s16, 1
      // Predicated region
      $region13: #{up_forward.4} parent=11 // pred_check
        %p261 = pneg %p63
      $region14: #{up_forward.4} parent=11 // pred_check_branch
        %263 = sbr.rel (%p261) target = $region16
      $region15: #{up_forward.4} parent=11 // pred_region
        _
      $region16: #{up_forward.4} parent=11 // pred_fallthru
        _
      // Predicated region
      $region17: #{up_forward.4} parent=11 // pred_check
        %p264 = pneg %p84
      $region18: #{up_forward.4} parent=11 // pred_check_branch
        %266 = sbr.rel (%p264) target = $region20
      $region19: #{up_forward.4} parent=11 // pred_region
        _
      $region20: #{up_forward.4} parent=11 // pred_fallthru
        _
      // Predicated region
      $region21: #{up_forward.4} parent=11 // pred_check
        %p267 = pneg %p105
      $region22: #{up_forward.4} parent=11 // pred_check_branch
        %269 = sbr.rel (%p267) target = $region24
      $region23: #{up_forward.4} parent=11 // pred_region
        _
      $region24: #{up_forward.4} parent=11 // pred_fallthru
        _
      // Predicated region
      $region25: #{up_forward.4} parent=11 // pred_check
        %p270 = pneg %p126
      $region26: #{up_forward.4} parent=11 // pred_check_branch
        %272 = sbr.rel (%p270) target = $region28
      $region27: #{up_forward.4} parent=11 // pred_region
        _
      $region28: #{up_forward.4} parent=11 // pred_fallthru
        _
      // Predicated region
      $region29: #{up_forward.4} parent=11 // pred_check
        %p273 = pneg %p147
      $region30: #{up_forward.4} parent=11 // pred_check_branch
        %275 = sbr.rel (%p273) target = $region32
      $region31: #{up_forward.4} parent=11 // pred_region
        _
      $region32: #{up_forward.4} parent=11 // pred_fallthru
        _
      // Predicated region
      $region33: #{up_forward.4} parent=11 // pred_check
        %p276 = pneg %p168
      $region34: #{up_forward.4} parent=11 // pred_check_branch
        %278 = sbr.rel (%p276) target = $region36
      $region35: #{up_forward.4} parent=11 // pred_region
        _
      $region36: #{up_forward.4} parent=11 // pred_fallthru
        _
    $region12: #{up_forward.4} parent=5 // pred_fallthru
      _
    %p279 = scmp.lt.s32.totalorder %s16, 2
    // Predicated region
    $region37: #{up_forward.4} parent=5 // pred_check
      %p280 = pneg %p279
    $region38: #{up_forward.4} parent=5 // pred_check_branch
      %282 = sbr.rel (%p280) target = $region40
    $region39: #{up_forward.4} parent=5 // pred_region
      // Predicated region
      $region41: #{up_forward.4} parent=39 // pred_check
        %p283 = pneg %p36
      $region42: #{up_forward.4} parent=39 // pred_check_branch
        %285 = sbr.rel (%p283) target = $region44
      $region43: #{up_forward.4} parent=39 // pred_region
        %p286 = scmp.lt.s32.totalorder %s16, 1
        %s287 = scalar_select %p286, %s16, 1
        %s288 = smul.addr %s287, 3
        %s289 = smul.addr %s288, 8
        %s290 = scalar_lea.vmem %s0, %s289
      $region44: #{up_forward.4} parent=39 // pred_fallthru
        _
    $region40: #{up_forward.4} parent=5 // pred_fallthru
      _
    %p291 = scmp.le.s32.totalorder 1, %s16
    %p292 = scmp.lt.s32.totalorder %s16, 3
    %p293 = pnand %p291, %p292
    %p294 = pneg %p293
    // Predicated region
    $region45: #{up_forward.4} parent=5 // pred_check
      _
    $region46: #{up_forward.4} parent=5 // pred_check_branch
      %296 = sbr.rel (%p293) target = $region48
    $region47: #{up_forward.4} parent=5 // pred_region
      %s297 = ssub.s32 %s16, 1
      %p298 = scmp.lt.s32.totalorder %s21, 1
      %s299 = scalar_select %p298, %s21, 1
      %s300 = smul.addr %s299, 3
      %s301 = smul.addr %s300, 8
      %s302 = scalar_lea.vmem %s0, %s301
      %p303 = pneg %p42
      %p304 = pneg %p39
      %p305 = pneg %p63
      %p306 = pneg %p60
      %p307 = pneg %p84
      %p308 = pneg %p81
      %p309 = pneg %p105
      %p310 = pneg %p102
      %p311 = pneg %p126
      %p312 = pneg %p123
      %p313 = pneg %p147
      %p314 = pneg %p144
      %p315 = pneg %p168
      %p316 = pneg %p165
      %p317 = pneg %p194
      %p318 = pneg %p191
      %p319 = scmp.lt.s32.totalorder %s21, 1
      %s320 = scalar_select %p319, %s21, 1
      %s321 = smul.addr %s320, 3
      %s322 = smul.addr %s321, 8
      %s323 = scalar_lea.vmem %s7, %s322
      %p324 = pneg %p220
      %p325 = pneg %p217
      %p326 = scmp.lt.s32.totalorder %s21, 1
      %s327 = scalar_select %p326, %s21, 1
      %s328 = scalar_lea.vmem %s8, %s327
      %p329 = pneg %p246
      %p330 = pneg %p243
      %p331 = scmp.lt.s32.totalorder %s21, 1
      %s332 = scalar_select %p331, %s21, 1
      %s333 = scalar_lea.vmem %s9, %s332
      %p334 = scmp.lt.s32.totalorder %s21, 1
      %s335 = scalar_select %p334, %s21, 1
      %s336 = smul.addr %s335, 3
      %s337 = smul.addr %s336, 8
      %s338 = scalar_lea.vmem %s0, %s337
      %p339 = scmp.lt.s32.totalorder %s21, 1
      %s340 = scalar_select %p339, %s21, 1
      %s341 = smul.addr %s340, 3
      %s342 = smul.addr %s341, 8
      %s343 = scalar_lea.vmem %s7, %s342
      %p344 = scmp.lt.s32.totalorder %s21, 1
      %s345 = scalar_select %p344, %s21, 1
      %s346 = scalar_lea.vmem %s8, %s345
      %p347 = scmp.lt.s32.totalorder %s21, 1
      %s348 = scalar_select %p347, %s21, 1
      %s349 = scalar_lea.vmem %s9, %s348
      %v351 = vld [vmem:[%s338] sm:$0xff]
      %v352 = vld [vmem:[%s338 + $0x8] sm:$0xff]
      %v353 = vld [vmem:[%s338 + $0x10] sm:$0xff]
      %v354 = vld [vmem:[%s1] sm:$0xff]
      %356 = vset.pattern.permute.xlu0 0
      %357 = vperm.xlu0 %356, %v354
      %v358 = vpop.permute.xlu0 %357
      %v360 = vmul.f32 %v351, %v358
      %v361 = vmul.f32 %v352, %v358
      %v362 = vmul.f32 %v353, %v358
      %v363 = vld [vmem:[%s2] sm:$0xff]
      %365 = vset.pattern.permute.xlu0 0
      %366 = vperm.xlu0 %365, %v363
      %v367 = vpop.permute.xlu0 %366
      %v369 = vadd.f32 %v360, %v367
      %v370 = vadd.f32 %v361, %v367
      %v371 = vadd.f32 %v362, %v367
      %v372 = vmax.f32 %v369, 0.0
      %v373 = vmax.f32 %v370, 0.0
      %v374 = vmax.f32 %v371, 0.0
      %v375 = vld [vmem:[%s5] sm:$0x7]
      %v377 = vlaneseq
      %v378 = vshrl.u32 %v377, 7
      %v379 = vsub.s32 0, %v378
      %v380 = vrot.slane %v375, %v379
      %v381 = vlaneseq
      %v382 = vshrl.u32 %v381, 7
      %v383 = vsub.s32 1, %v382
      %v384 = vrot.slane %v375, %v383
      %v385 = vlaneseq
      %v386 = vshrl.u32 %v385, 7
      %v387 = vsub.s32 2, %v386
      %v388 = vrot.slane %v375, %v387
      %v392 = vmul.f32 %v372, %v380
      %v393 = vmul.f32 %v373, %v384
      %v394 = vmul.f32 %v374, %v388
      %v395 = vpack.c.bf16 %v392, %v392
      %v396 = vpack.c.bf16 %v393, %v393
      %v397 = vpack.c.bf16 %v394, %v394
      %v401 = vrot.slane %v395, 4
      %v402 = vrot.slane %v396, 4
      %v403 = vrot.slane %v397, 4
      %404 = vrot.lane.b32.xlu0 %v401, 127
      %v405 = vpop.permute.xlu0 %404
      %406 = vrot.lane.b32.xlu0 %v402, 127
      %v407 = vpop.permute.xlu0 %406
      %408 = vrot.lane.b32.xlu0 %v403, 127
      %v409 = vpop.permute.xlu0 %408
      %vm410 = vcmask 1039360
      %v411 = vsel %vm410, %v405, %v407
      %v412 = vsel %vm410, %v407, %v409
      %413 = vrot.lane.b32.xlu0 %v395, 126
      %v414 = vpop.permute.xlu0 %413
      %415 = vrot.lane.b32.xlu0 %v396, 126
      %v416 = vpop.permute.xlu0 %415
      %417 = vrot.lane.b32.xlu0 %v397, 126
      %v418 = vpop.permute.xlu0 %417
      %vm419 = vcmask 1031168
      %v420 = vsel %vm419, %v414, %v416
      %v421 = vsel %vm419, %v416, %v418
      %422 = vrot.lane.b32.xlu0 %v401, 110
      %v423 = vpop.permute.xlu0 %422
      %424 = vrot.lane.b32.xlu0 %v402, 110
      %v425 = vpop.permute.xlu0 %424
      %426 = vrot.lane.b32.xlu0 %v403, 110
      %v427 = vpop.permute.xlu0 %426
      %vm428 = vcmask 900096
      %v429 = vsel %vm428, %v423, %v425
      %v430 = vsel %vm428, %v425, %v427
      %431 = vrot.lane.b32.xlu0 %v395, 109
      %v432 = vpop.permute.xlu0 %431
      %433 = vrot.lane.b32.xlu0 %v396, 109
      %v434 = vpop.permute.xlu0 %433
      %435 = vrot.lane.b32.xlu0 %v397, 109
      %v436 = vpop.permute.xlu0 %435
      %vm437 = vcmask 891904
      %v438 = vsel %vm437, %v432, %v434
      %v439 = vsel %vm437, %v434, %v436
      %440 = vrot.lane.b32.xlu0 %v401, 108
      %v441 = vpop.permute.xlu0 %440
      %442 = vrot.lane.b32.xlu0 %v402, 108
      %v443 = vpop.permute.xlu0 %442
      %444 = vrot.lane.b32.xlu0 %v403, 108
      %v445 = vpop.permute.xlu0 %444
      %vm446 = vcmask 883712
      %v447 = vsel %vm446, %v441, %v443
      %v448 = vsel %vm446, %v443, %v445
      %449 = vrot.lane.b32.xlu0 %v395, 92
      %v450 = vpop.permute.xlu0 %449
      %451 = vrot.lane.b32.xlu0 %v396, 92
      %v452 = vpop.permute.xlu0 %451
      %453 = vrot.lane.b32.xlu0 %v397, 92
      %v454 = vpop.permute.xlu0 %453
      %vm455 = vcmask 752640
      %v456 = vsel %vm455, %v450, %v452
      %v457 = vsel %vm455, %v452, %v454
      %458 = vrot.lane.b32.xlu0 %v401, 91
      %v459 = vpop.permute.xlu0 %458
      %460 = vrot.lane.b32.xlu0 %v402, 91
      %v461 = vpop.permute.xlu0 %460
      %462 = vrot.lane.b32.xlu0 %v403, 91
      %v463 = vpop.permute.xlu0 %462
      %vm464 = vcmask 744448
      %v465 = vsel %vm464, %v459, %v461
      %v466 = vsel %vm464, %v461, %v463
      %467 = vrot.lane.b32.xlu0 %v395, 90
      %v468 = vpop.permute.xlu0 %467
      %469 = vrot.lane.b32.xlu0 %v396, 90
      %v470 = vpop.permute.xlu0 %469
      %471 = vrot.lane.b32.xlu0 %v397, 90
      %v472 = vpop.permute.xlu0 %471
      %vm473 = vcmask 736256
      %v474 = vsel %vm473, %v468, %v470
      %v475 = vsel %vm473, %v470, %v472
      %vm476 = vcmask 1043456
      %v479 = vsel %vm476, %v395, %v411
      %v483 = vsel %vm476, %v396, %v412
      %v487 = vsel %vm476, %v397, %v409
      %v491 = vsel %vm476, %v420, %v429
      %v495 = vsel %vm476, %v421, %v430
      %v499 = vsel %vm476, %v418, %v427
      %v503 = vsel %vm476, %v438, %v447
      %v507 = vsel %vm476, %v439, %v448
      %v511 = vsel %vm476, %v436, %v445
      %v515 = vsel %vm476, %v456, %v465
      %v519 = vsel %vm476, %v457, %v466
      %v523 = vsel %vm476, %v454, %v463
      %v525 = vld [vmem:[%s3] sm:$0xf]
      %v526 = vld [vmem:[%s4] sm:$0xff]
      %528 = vset.pattern.permute.xlu0 0
      %529 = vperm.xlu0 %528, %v526
      %v530 = vpop.permute.xlu0 %529
      %vm532 = vcmask 588800
      %v534 = vsel %vm532, %v525, 0
      %v537 = vsel %vm476, %v474, 0
      %v540 = vsel %vm476, %v475, 0
      %v543 = vsel %vm476, %v472, 0
      %545 = vmatprep.subr.bf16.mxu0 %v483
      %546 = vmatpush1.bf16.msra.mxu0 %v479
      %547 = vmatprep.subr.bf16.mxu0 %v495
      %548 = vmatpush1.bf16.msra.mxu0 %v491
      %549 = vmatprep.subr.bf16.mxu0 %v507
      %550 = vmatpush1.bf16.msra.mxu0 %v503
      %551 = vmatprep.subr.bf16.mxu0 %v519
      %552 = vmatpush1.bf16.msra.mxu0 %v515
      %553 = vmatprep.subr.bf16.mxu0 %v540
      %554 = vmatpush1.bf16.msra.mxu0 %v537
      %555 = vmatprep.subr.bf16.mxu0 0
      %556 = vmatpush1.bf16.msra.mxu0 0
      %557 = vmatprep.subr.bf16.mxu0 0
      %558 = vmatpush1.bf16.msra.mxu0 0
      %559 = vmatprep.subr.bf16.mxu0 0
      %560 = vmatpush1.bf16.msra.mxu0 0
      %561 = vmatprep.subr.bf16.mxu0 0
      %562 = vmatpush1.bf16.msra.mxu0 0
      %563 = vmatprep.subr.bf16.mxu0 0
      %564 = vmatpush1.bf16.msra.mxu0 0
      %565 = vmatprep.subr.bf16.mxu0 0
      %566 = vmatpush1.bf16.msra.mxu0 0
      %567 = vmatprep.subr.bf16.mxu0 0
      %568 = vmatpush1.bf16.msra.mxu0 0
      %569 = vmatprep.subr.bf16.mxu0 0
      %570 = vmatpush1.bf16.msra.mxu0 0
      %571 = vmatprep.subr.bf16.mxu0 0
      %572 = vmatpush1.bf16.msra.mxu0 0
      %573 = vmatprep.subr.bf16.mxu0 0
      %574 = vmatpush1.bf16.msra.mxu0 0
      %575 = vmatprep.subr.bf16.mxu0 0
      %576 = vmatpush1.bf16.msra.mxu0 0
      %577 = vmatprep.mubr.bf16.mxu0 0
      %578 = vmatmul.mubr.bf16.gmra.mrb[0].mxu0 %v534
      %v579 = vpop.f32.mrb[0].mxu0
      %v580 = vadd.f32 %v530, %v579
      %v581 = vpop.f32.mrb[0].mxu0
      %v582 = vadd.f32 %v530, %v581
      %v583 = vpop.f32.mrb[0].mxu0
      %v584 = vpop.f32.mrb[0].mxu0
      %585 = vdwg.mxu0
      %586 = vmatprep.subr.bf16.mxu0 0
      %587 = vmatpush1.bf16.msra.mxu0 %v487
      %588 = vmatprep.subr.bf16.mxu0 0
      %589 = vmatpush1.bf16.msra.mxu0 %v499
      %590 = vmatprep.subr.bf16.mxu0 0
      %591 = vmatpush1.bf16.msra.mxu0 %v511
      %592 = vmatprep.subr.bf16.mxu0 0
      %593 = vmatpush1.bf16.msra.mxu0 %v523
      %594 = vmatprep.subr.bf16.mxu0 0
      %595 = vmatpush1.bf16.msra.mxu0 %v543
      %596 = vmatprep.subr.bf16.mxu0 0
      %597 = vmatpush1.bf16.msra.mxu0 0
      %598 = vmatprep.subr.bf16.mxu0 0
      %599 = vmatpush1.bf16.msra.mxu0 0
      %600 = vmatprep.subr.bf16.mxu0 0
      %601 = vmatpush1.bf16.msra.mxu0 0
      %602 = vmatprep.subr.bf16.mxu0 0
      %603 = vmatpush1.bf16.msra.mxu0 0
      %604 = vmatprep.subr.bf16.mxu0 0
      %605 = vmatpush1.bf16.msra.mxu0 0
      %606 = vmatprep.subr.bf16.mxu0 0
      %607 = vmatpush1.bf16.msra.mxu0 0
      %608 = vmatprep.subr.bf16.mxu0 0
      %609 = vmatpush1.bf16.msra.mxu0 0
      %610 = vmatprep.subr.bf16.mxu0 0
      %611 = vmatpush1.bf16.msra.mxu0 0
      %612 = vmatprep.subr.bf16.mxu0 0
      %613 = vmatpush1.bf16.msra.mxu0 0
      %614 = vmatprep.subr.bf16.mxu0 0
      %615 = vmatpush1.bf16.msra.mxu0 0
      %616 = vmatprep.subr.bf16.mxu0 0
      %617 = vmatpush1.bf16.msra.mxu0 0
      %618 = vmatprep.mubr.bf16.mxu0 0
      %619 = vmatmul.mubr.bf16.gmra.mrb[0].mxu0 %v534
      %v620 = vpop.f32.mrb[0].mxu0
      %v621 = vadd.f32 %v530, %v620
      %v622 = vpop.f32.mrb[0].mxu0
      %v623 = vpop.f32.mrb[0].mxu0
      %v624 = vpop.f32.mrb[0].mxu0
      %625 = vdwg.mxu0
      %v626 = vld [vmem:[%s6] sm:$0x7]
      %v628 = vlaneseq
      %v629 = vshrl.u32 %v628, 7
      %v630 = vsub.s32 0, %v629
      %v631 = vrot.slane %v626, %v630
      %v632 = vlaneseq
      %v633 = vshrl.u32 %v632, 7
      %v634 = vsub.s32 1, %v633
      %v635 = vrot.slane %v626, %v634
      %v636 = vlaneseq
      %v637 = vshrl.u32 %v636, 7
      %v638 = vsub.s32 2, %v637
      %v639 = vrot.slane %v626, %v638
      %v643 = vmul.f32 %v580, %v631
      %v644 = vmul.f32 %v582, %v635
      %v645 = vmul.f32 %v621, %v639
      %v646 = vadd.f32 %v643, %v644
      %vm647 = vcmask 261120
      %v648 = vsel %vm647, %v645, 0.0
      %v649 = vadd.f32 %v646, %v648
      %650 = vadd.xlane.f32.xlu0 %v649
      %v651 = vpop.xlane.xlu0 %650
      %v653 = vlaneseq
      %v654 = vand.u32 %v653, 127
      %v655 = vlaneseq
      %v656 = vshrl.u32 %v655, 7
      %v657 = vsub.s32 %v654, %v656
      %v658 = vrot.slane %v651, %v657
      %vm660 = vcmask 57344
      %661 = vst.msk [vmem:[%s346] sm:$0x1] %vm660, %v658
      %v662 = vmul.f32 %v643, %v643
      %v663 = vmul.f32 %v644, %v644
      %v664 = vmul.f32 %v645, %v645
      %v665 = vadd.f32 %v662, %v663
      %v666 = vsel %vm647, %v664, 0.0
      %v667 = vadd.f32 %v665, %v666
      %668 = vadd.xlane.f32.xlu0 %v667
      %v669 = vpop.xlane.xlu0 %668
      %v671 = vlaneseq
      %v672 = vshrl.u32 %v671, 7
      %v673 = vsub.s32 %v654, %v672
      %v674 = vrot.slane %v669, %v673
      %676 = vst.msk [vmem:[%s349] sm:$0x1] %vm660, %v674
      %677 = vst [vmem:[%s343] sm:$0xff] %v643
      %678 = vst [vmem:[%s343 + $0x8] sm:$0xff] %v644
      %679 = vst.msk [vmem:[%s343 + $0x10] sm:$0xff] %vm647, %v645
      %p680 = scmp.lt.s32.totalorder %s21, 1
      %s681 = scalar_select %p680, %s21, 1
      %s682 = smul.addr %s681, 3
      %s683 = smul.addr %s682, 8
      %s684 = scalar_lea.vmem %s7, %s683
      %p685 = scmp.lt.s32.totalorder %s21, 1
      %s686 = scalar_select %p685, %s21, 1
      %s687 = scalar_lea.vmem %s8, %s686
      %p688 = scmp.lt.s32.totalorder %s21, 1
      %s689 = scalar_select %p688, %s21, 1
      %s690 = scalar_lea.vmem %s9, %s689
      // Predicated region
      $region49: #{up_forward.4} parent=47 // pred_check
        %p691 = pneg %p191
      $region50: #{up_forward.4} parent=47 // pred_check_branch
        %693 = sbr.rel (%p691) target = $region52
      $region51: #{up_forward.4} parent=47 // pred_region
        _
      $region52: #{up_forward.4} parent=47 // pred_fallthru
        _
      // Predicated region
      $region53: #{up_forward.4} parent=47 // pred_check
        %p694 = pneg %p217
      $region54: #{up_forward.4} parent=47 // pred_check_branch
        %696 = sbr.rel (%p694) target = $region56
      $region55: #{up_forward.4} parent=47 // pred_region
        _
      $region56: #{up_forward.4} parent=47 // pred_fallthru
        _
      // Predicated region
      $region57: #{up_forward.4} parent=47 // pred_check
        %p697 = pneg %p243
      $region58: #{up_forward.4} parent=47 // pred_check_branch
        %699 = sbr.rel (%p697) target = $region60
      $region59: #{up_forward.4} parent=47 // pred_region
        _
      $region60: #{up_forward.4} parent=47 // pred_fallthru
        _
    $region48: #{up_forward.4} parent=5 // pred_fallthru
      _
    %p700 = scmp.le.s32.totalorder 2, %s16
    // Predicated region
    $region61: #{up_forward.4} parent=5 // pred_check
      %p701 = pneg %p700
    $region62: #{up_forward.4} parent=5 // pred_check_branch
      %703 = sbr.rel (%p701) target = $region64
    $region63: #{up_forward.4} parent=5 // pred_region
      %s704 = ssub.s32 %s16, 2
      // Predicated region
      $region65: #{up_forward.4} parent=63 // pred_check
        %p705 = pneg %p197
      $region66: #{up_forward.4} parent=63 // pred_check_branch
        %707 = sbr.rel (%p705) target = $region68
      $region67: #{up_forward.4} parent=63 // pred_region
        %p708 = scmp.lt.s32.totalorder %s22, 1
        %s709 = scalar_select %p708, %s22, 1
        %s710 = smul.addr %s709, 3
        %s711 = smul.addr %s710, 8
        %s712 = scalar_lea.vmem %s7, %s711
      $region68: #{up_forward.4} parent=63 // pred_fallthru
        _
      // Predicated region
      $region69: #{up_forward.4} parent=63 // pred_check
        %p713 = pneg %p223
      $region70: #{up_forward.4} parent=63 // pred_check_branch
        %715 = sbr.rel (%p713) target = $region72
      $region71: #{up_forward.4} parent=63 // pred_region
        %p716 = scmp.lt.s32.totalorder %s22, 1
        %s717 = scalar_select %p716, %s22, 1
        %s718 = scalar_lea.vmem %s8, %s717
      $region72: #{up_forward.4} parent=63 // pred_fallthru
        _
      // Predicated region
      $region73: #{up_forward.4} parent=63 // pred_check
        %p719 = pneg %p249
      $region74: #{up_forward.4} parent=63 // pred_check_branch
        %721 = sbr.rel (%p719) target = $region76
      $region75: #{up_forward.4} parent=63 // pred_region
        %p722 = scmp.lt.s32.totalorder %s22, 1
        %s723 = scalar_select %p722, %s22, 1
        %s724 = scalar_lea.vmem %s9, %s723
      $region76: #{up_forward.4} parent=63 // pred_fallthru
        _
    $region64: #{up_forward.4} parent=5 // pred_fallthru
      _
  $region6: #{up_forward.4} parent=0 // loop_footer
    %s20 = sadd.s32 1, %s16
  $region7: #{up_forward.4} parent=0 // loop_footer_branch
    %15 = sbr.rel target = $region3
  $region8: #{up_forward.4} parent=0 // loop_exit
    _

// kernel: up_forward.3
$region0: #{up_forward.3}
  #allocation0 [shape = 'u32[]', space=smem, size = 0x4, offset = 0x4, fixed_abs, tag = 'smem constant byte address 0x4 - core index']
  #allocation1 [shape = 'u32[144,128]{1,0:T(1,128)}', space=vmem, size = 0x12000, scoped, tag = 'internal scratch']
  %s0 = inlined_call_operand.vmem [shape: bf16[2,8,326], index: 0, kind: input, shape index: {}]
  %s1 = inlined_call_operand.vmem [shape: bf16[2,8,326], index: 1, kind: input, shape index: {}]
  %s2 = inlined_call_operand.vmem [shape: bf16[8,144], index: 2, kind: input, shape index: {}]
  %s3 = inlined_call_operand.vmem [shape: f32[8,1], index: 3, kind: input, shape index: {}]
  %s4 = inlined_call_operand.vmem [shape: f32[1,288], index: 4, kind: input, shape index: {}]
  %s5 = inlined_call_operand.vmem [shape: f32[2,8,326], index: 5, kind: output, shape index: {0}]
  %s6 = inlined_call_operand.vmem [shape: f32[2,1,8], index: 6, kind: output, shape index: {1}]
  %s7 = inlined_call_operand.vmem [shape: f32[2,1,8], index: 7, kind: output, shape index: {2}]
  %8 = xla_tuple %s5, %s6, %s7
  %s9 = sld [smem:[#allocation0]]
  $region69: #{up_forward.3} parent=0
    _
  %s11 = ssub.s32 1, %s9
  %s12 = scalar_select 0, %s11, %s9
  loop: start=0, step=1, limit=4
  $region2: #{up_forward.3} parent=0 // loop_pre_header
    _
  $region3: #{up_forward.3} parent=0 // loop_header
    %s14 = sphi 0, %s18
    %p15 = scmp.ge.s32.totalorder %s14, 4
    %s24 = sphi 0, %s26
    %s27 = sphi 0, %s24
    %s28 = sphi 0, %s27
    %s44 = sphi 0, %s28
    %s50 = sphi 0, %s52
    %s53 = sphi 0, %s50
    %s54 = sphi 0, %s53
    %s70 = sphi 0, %s54
    %s74 = sphi 0, %s74
    %s76 = sphi 0, %s74
    %s77 = sphi 0, %s76
    %s91 = sphi 0, %s77
    %s95 = sphi 0, %s95
    %s97 = sphi 0, %s95
    %s98 = sphi 0, %s97
    %s112 = sphi 0, %s98
    %s116 = sphi 0, %s116
    %s118 = sphi 0, %s116
    %s119 = sphi 0, %s118
    %s133 = sphi 0, %s119
    %s139 = sphi 0, %s141
    %s142 = sphi 0, %s139
    %s143 = sphi 0, %s142
    %s159 = sphi 0, %s143
    %s165 = sphi 0, %s167
    %s168 = sphi 0, %s165
    %s169 = sphi 0, %s168
    %s185 = sphi 0, %s169
    %s191 = sphi 0, %s193
    %s194 = sphi 0, %s191
    %s195 = sphi 0, %s194
    %s211 = sphi 0, %s195
  $region4: #{up_forward.3} parent=0 // loop_header_branch
    %17 = sbr.rel (%p15) target = $region8
  $region5: #{up_forward.3} parent=0 // loop_body
    %s19 = ssub.s32 %s14, 1
    %s20 = ssub.s32 %s14, 2
    %s21 = sadd.s32 %s14, 1
    %s22 = ssub.s32 %s14, %s21
    %p23 = scmp.eq.s32.totalorder %s22, 0
    %s25 = sadd.s32 %s24, 1
    %s26 = scalar_select %p23, %s24, %s25
    %p29 = pneg %p23
    %p30 = scmp.eq.s32.totalorder %s14, 1
    %p31 = por %p29, %p30
    %p32 = scmp.ne.s32.totalorder %s24, %s27
    %p33 = scmp.eq.s32.totalorder %s14, 0
    %p34 = por %p32, %p33
    %p35 = scmp.ne.s32.totalorder %s24, %s27
    %p36 = scmp.eq.s32.totalorder %s19, 1
    %p37 = por %p35, %p36
    %p38 = scmp.ne.s32.totalorder %s27, %s28
    %p39 = scmp.eq.s32.totalorder %s19, 0
    %p40 = por %p38, %p39
    %p41 = scmp.ne.s32.totalorder %s27, %s28
    %p42 = scmp.eq.s32.totalorder %s20, 1
    %p43 = por %p41, %p42
    %p45 = scmp.ne.s32.totalorder %s28, %s44
    %p46 = scmp.eq.s32.totalorder %s20, 0
    %p47 = por %p45, %p46
    %s48 = ssub.s32 %s14, %s21
    %p49 = scmp.eq.s32.totalorder %s48, 0
    %s51 = sadd.s32 %s50, 1
    %s52 = scalar_select %p49, %s50, %s51
    %p55 = pneg %p49
    %p56 = scmp.eq.s32.totalorder %s14, 1
    %p57 = por %p55, %p56
    %p58 = scmp.ne.s32.totalorder %s50, %s53
    %p59 = scmp.eq.s32.totalorder %s14, 0
    %p60 = por %p58, %p59
    %p61 = scmp.ne.s32.totalorder %s50, %s53
    %p62 = scmp.eq.s32.totalorder %s19, 1
    %p63 = por %p61, %p62
    %p64 = scmp.ne.s32.totalorder %s53, %s54
    %p65 = scmp.eq.s32.totalorder %s19, 0
    %p66 = por %p64, %p65
    %p67 = scmp.ne.s32.totalorder %s53, %s54
    %p68 = scmp.eq.s32.totalorder %s20, 1
    %p69 = por %p67, %p68
    %p71 = scmp.ne.s32.totalorder %s54, %s70
    %p72 = scmp.eq.s32.totalorder %s20, 0
    %p73 = por %p71, %p72
    %s75 = sadd.s32 %s74, 1
    %p78 = scmp.eq.s32.totalorder %s14, 1
    %p79 = scmp.ne.s32.totalorder %s74, %s76
    %p80 = scmp.eq.s32.totalorder %s14, 0
    %p81 = por %p79, %p80
    %p82 = scmp.ne.s32.totalorder %s74, %s76
    %p83 = scmp.eq.s32.totalorder %s19, 1
    %p84 = por %p82, %p83
    %p85 = scmp.ne.s32.totalorder %s76, %s77
    %p86 = scmp.eq.s32.totalorder %s19, 0
    %p87 = por %p85, %p86
    %p88 = scmp.ne.s32.totalorder %s76, %s77
    %p89 = scmp.eq.s32.totalorder %s20, 1
    %p90 = por %p88, %p89
    %p92 = scmp.ne.s32.totalorder %s77, %s91
    %p93 = scmp.eq.s32.totalorder %s20, 0
    %p94 = por %p92, %p93
    %s96 = sadd.s32 %s95, 1
    %p99 = scmp.eq.s32.totalorder %s14, 1
    %p100 = scmp.ne.s32.totalorder %s95, %s97
    %p101 = scmp.eq.s32.totalorder %s14, 0
    %p102 = por %p100, %p101
    %p103 = scmp.ne.s32.totalorder %s95, %s97
    %p104 = scmp.eq.s32.totalorder %s19, 1
    %p105 = por %p103, %p104
    %p106 = scmp.ne.s32.totalorder %s97, %s98
    %p107 = scmp.eq.s32.totalorder %s19, 0
    %p108 = por %p106, %p107
    %p109 = scmp.ne.s32.totalorder %s97, %s98
    %p110 = scmp.eq.s32.totalorder %s20, 1
    %p111 = por %p109, %p110
    %p113 = scmp.ne.s32.totalorder %s98, %s112
    %p114 = scmp.eq.s32.totalorder %s20, 0
    %p115 = por %p113, %p114
    %s117 = sadd.s32 %s116, 1
    %p120 = scmp.eq.s32.totalorder %s14, 1
    %p121 = scmp.ne.s32.totalorder %s116, %s118
    %p122 = scmp.eq.s32.totalorder %s14, 0
    %p123 = por %p121, %p122
    %p124 = scmp.ne.s32.totalorder %s116, %s118
    %p125 = scmp.eq.s32.totalorder %s19, 1
    %p126 = por %p124, %p125
    %p127 = scmp.ne.s32.totalorder %s118, %s119
    %p128 = scmp.eq.s32.totalorder %s19, 0
    %p129 = por %p127, %p128
    %p130 = scmp.ne.s32.totalorder %s118, %s119
    %p131 = scmp.eq.s32.totalorder %s20, 1
    %p132 = por %p130, %p131
    %p134 = scmp.ne.s32.totalorder %s119, %s133
    %p135 = scmp.eq.s32.totalorder %s20, 0
    %p136 = por %p134, %p135
    %s137 = ssub.s32 %s14, %s21
    %p138 = scmp.eq.s32.totalorder %s137, 0
    %s140 = sadd.s32 %s139, 1
    %s141 = scalar_select %p138, %s139, %s140
    %p144 = pneg %p138
    %p145 = scmp.eq.s32.totalorder %s14, 1
    %p146 = por %p144, %p145
    %p147 = scmp.ne.s32.totalorder %s139, %s142
    %p148 = scmp.eq.s32.totalorder %s14, 0
    %p149 = por %p147, %p148
    %p150 = scmp.ne.s32.totalorder %s139, %s142
    %p151 = scmp.eq.s32.totalorder %s19, 1
    %p152 = por %p150, %p151
    %p153 = scmp.ne.s32.totalorder %s142, %s143
    %p154 = scmp.eq.s32.totalorder %s19, 0
    %p155 = por %p153, %p154
    %p156 = scmp.ne.s32.totalorder %s142, %s143
    %p157 = scmp.eq.s32.totalorder %s20, 1
    %p158 = por %p156, %p157
    %p160 = scmp.ne.s32.totalorder %s143, %s159
    %p161 = scmp.eq.s32.totalorder %s20, 0
    %p162 = por %p160, %p161
    %s163 = ssub.s32 %s14, %s21
    %p164 = scmp.eq.s32.totalorder %s163, 0
    %s166 = sadd.s32 %s165, 1
    %s167 = scalar_select %p164, %s165, %s166
    %p170 = pneg %p164
    %p171 = scmp.eq.s32.totalorder %s14, 1
    %p172 = por %p170, %p171
    %p173 = scmp.ne.s32.totalorder %s165, %s168
    %p174 = scmp.eq.s32.totalorder %s14, 0
    %p175 = por %p173, %p174
    %p176 = scmp.ne.s32.totalorder %s165, %s168
    %p177 = scmp.eq.s32.totalorder %s19, 1
    %p178 = por %p176, %p177
    %p179 = scmp.ne.s32.totalorder %s168, %s169
    %p180 = scmp.eq.s32.totalorder %s19, 0
    %p181 = por %p179, %p180
    %p182 = scmp.ne.s32.totalorder %s168, %s169
    %p183 = scmp.eq.s32.totalorder %s20, 1
    %p184 = por %p182, %p183
    %p186 = scmp.ne.s32.totalorder %s169, %s185
    %p187 = scmp.eq.s32.totalorder %s20, 0
    %p188 = por %p186, %p187
    %s189 = ssub.s32 %s14, %s21
    %p190 = scmp.eq.s32.totalorder %s189, 0
    %s192 = sadd.s32 %s191, 1
    %s193 = scalar_select %p190, %s191, %s192
    %p196 = pneg %p190
    %p197 = scmp.eq.s32.totalorder %s14, 1
    %p198 = por %p196, %p197
    %p199 = scmp.ne.s32.totalorder %s191, %s194
    %p200 = scmp.eq.s32.totalorder %s14, 0
    %p201 = por %p199, %p200
    %p202 = scmp.ne.s32.totalorder %s191, %s194
    %p203 = scmp.eq.s32.totalorder %s19, 1
    %p204 = por %p202, %p203
    %p205 = scmp.ne.s32.totalorder %s194, %s195
    %p206 = scmp.eq.s32.totalorder %s19, 0
    %p207 = por %p205, %p206
    %p208 = scmp.ne.s32.totalorder %s194, %s195
    %p209 = scmp.eq.s32.totalorder %s20, 1
    %p210 = por %p208, %p209
    %p212 = scmp.ne.s32.totalorder %s195, %s211
    %p213 = scmp.eq.s32.totalorder %s20, 0
    %p214 = por %p212, %p213
    %p215 = scmp.le.s32.totalorder 1, %s14
    %p216 = scmp.lt.s32.totalorder %s14, 3
    %p217 = pnand %p215, %p216
    %p218 = pneg %p217
    // Predicated region
    $region9: #{up_forward.3} parent=5 // pred_check
      _
    $region10: #{up_forward.3} parent=5 // pred_check_branch
      %220 = sbr.rel (%p217) target = $region12
    $region11: #{up_forward.3} parent=5 // pred_region
      %s221 = ssub.s32 %s14, 1
      // Predicated region
      $region13: #{up_forward.3} parent=11 // pred_check
        %p222 = pneg %p87
      $region14: #{up_forward.3} parent=11 // pred_check_branch
        %224 = sbr.rel (%p222) target = $region16
      $region15: #{up_forward.3} parent=11 // pred_region
        _
      $region16: #{up_forward.3} parent=11 // pred_fallthru
        _
      // Predicated region
      $region17: #{up_forward.3} parent=11 // pred_check
        %p225 = pneg %p108
      $region18: #{up_forward.3} parent=11 // pred_check_branch
        %227 = sbr.rel (%p225) target = $region20
      $region19: #{up_forward.3} parent=11 // pred_region
        _
      $region20: #{up_forward.3} parent=11 // pred_fallthru
        _
      // Predicated region
      $region21: #{up_forward.3} parent=11 // pred_check
        %p228 = pneg %p129
      $region22: #{up_forward.3} parent=11 // pred_check_branch
        %230 = sbr.rel (%p228) target = $region24
      $region23: #{up_forward.3} parent=11 // pred_region
        _
      $region24: #{up_forward.3} parent=11 // pred_fallthru
        _
    $region12: #{up_forward.3} parent=5 // pred_fallthru
      _
    %p231 = scmp.lt.s32.totalorder %s14, 2
    // Predicated region
    $region25: #{up_forward.3} parent=5 // pred_check
      %p232 = pneg %p231
    $region26: #{up_forward.3} parent=5 // pred_check_branch
      %234 = sbr.rel (%p232) target = $region28
    $region27: #{up_forward.3} parent=5 // pred_region
      // Predicated region
      $region29: #{up_forward.3} parent=27 // pred_check
        %p235 = pneg %p34
      $region30: #{up_forward.3} parent=27 // pred_check_branch
        %237 = sbr.rel (%p235) target = $region32
      $region31: #{up_forward.3} parent=27 // pred_region
        %p238 = scmp.lt.s32.totalorder %s14, 1
        %s239 = scalar_select %p238, %s14, 1
        %s240 = smul.addr %s239, 3
        %s241 = smul.addr %s240, 4
        %s242 = scalar_lea.vmem %s0, %s241
      $region32: #{up_forward.3} parent=27 // pred_fallthru
        _
      // Predicated region
      $region33: #{up_forward.3} parent=27 // pred_check
        %p243 = pneg %p60
      $region34: #{up_forward.3} parent=27 // pred_check_branch
        %245 = sbr.rel (%p243) target = $region36
      $region35: #{up_forward.3} parent=27 // pred_region
        %p246 = scmp.lt.s32.totalorder %s14, 1
        %s247 = scalar_select %p246, %s14, 1
        %s248 = smul.addr %s247, 3
        %s249 = smul.addr %s248, 4
        %s250 = scalar_lea.vmem %s1, %s249
      $region36: #{up_forward.3} parent=27 // pred_fallthru
        _
    $region28: #{up_forward.3} parent=5 // pred_fallthru
      _
    %p251 = scmp.le.s32.totalorder 1, %s14
    %p252 = scmp.lt.s32.totalorder %s14, 3
    %p253 = pnand %p251, %p252
    %p254 = pneg %p253
    // Predicated region
    $region37: #{up_forward.3} parent=5 // pred_check
      _
    $region38: #{up_forward.3} parent=5 // pred_check_branch
      %256 = sbr.rel (%p253) target = $region40
    $region39: #{up_forward.3} parent=5 // pred_region
      %s257 = ssub.s32 %s14, 1
      %p258 = scmp.lt.s32.totalorder %s19, 1
      %s259 = scalar_select %p258, %s19, 1
      %s260 = smul.addr %s259, 3
      %s261 = smul.addr %s260, 4
      %s262 = scalar_lea.vmem %s0, %s261
      %p263 = pneg %p40
      %p264 = pneg %p37
      %p265 = scmp.lt.s32.totalorder %s19, 1
      %s266 = scalar_select %p265, %s19, 1
      %s267 = smul.addr %s266, 3
      %s268 = smul.addr %s267, 4
      %s269 = scalar_lea.vmem %s1, %s268
      %p270 = pneg %p66
      %p271 = pneg %p63
      %p272 = pneg %p87
      %p273 = pneg %p84
      %p274 = pneg %p108
      %p275 = pneg %p105
      %p276 = pneg %p129
      %p277 = pneg %p126
      %p278 = pneg %p155
      %p279 = pneg %p152
      %p280 = scmp.lt.s32.totalorder %s19, 1
      %s281 = scalar_select %p280, %s19, 1
      %s282 = smul.addr %s281, 3
      %s283 = smul.addr %s282, 8
      %s284 = scalar_lea.vmem %s5, %s283
      %p285 = pneg %p181
      %p286 = pneg %p178
      %p287 = scmp.lt.s32.totalorder %s19, 1
      %s288 = scalar_select %p287, %s19, 1
      %s289 = scalar_lea.vmem %s6, %s288
      %p290 = pneg %p207
      %p291 = pneg %p204
      %p292 = scmp.lt.s32.totalorder %s19, 1
      %s293 = scalar_select %p292, %s19, 1
      %s294 = scalar_lea.vmem %s7, %s293
      %p295 = scmp.lt.s32.totalorder %s19, 1
      %s296 = scalar_select %p295, %s19, 1
      %s297 = smul.addr %s296, 3
      %s298 = smul.addr %s297, 4
      %s299 = scalar_lea.vmem %s0, %s298
      %p300 = scmp.lt.s32.totalorder %s19, 1
      %s301 = scalar_select %p300, %s19, 1
      %s302 = smul.addr %s301, 3
      %s303 = smul.addr %s302, 4
      %s304 = scalar_lea.vmem %s1, %s303
      %p305 = scmp.lt.s32.totalorder %s19, 1
      %s306 = scalar_select %p305, %s19, 1
      %s307 = smul.addr %s306, 3
      %s308 = smul.addr %s307, 8
      %s309 = scalar_lea.vmem %s5, %s308
      %p310 = scmp.lt.s32.totalorder %s19, 1
      %s311 = scalar_select %p310, %s19, 1
      %s312 = scalar_lea.vmem %s6, %s311
      %p313 = scmp.lt.s32.totalorder %s19, 1
      %s314 = scalar_select %p313, %s19, 1
      %s315 = scalar_lea.vmem %s7, %s314
      %v317 = vld [vmem:[%s299] sm:$0xff]
      %v318 = vld [vmem:[%s299 + $0x8] sm:$0xf]
      %v321 = vunpack.c.l.b16 %v317
      %v322 = vunpack.c.h.b16 %v317
      %v323 = vunpack.c.l.b16 %v318
      %v324 = vpack.c.b16 %v321, %v321
      %v325 = vpack.c.b16 %v322, %v322
      %v326 = vpack.c.b16 %v323, %v323
      %327 = vrot.lane.b32.xlu0 %v324, 127
      %v328 = vpop.permute.xlu0 %327
      %329 = vrot.lane.b32.xlu0 %v325, 127
      %v330 = vpop.permute.xlu0 %329
      %331 = vrot.lane.b32.xlu0 %v326, 127
      %v332 = vpop.permute.xlu0 %331
      %vm333 = vcmask 1039360
      %v334 = vsel %vm333, %v328, %v330
      %v335 = vsel %vm333, %v330, %v332
      %336 = vrot.lane.b32.xlu0 %v324, 126
      %v337 = vpop.permute.xlu0 %336
      %338 = vrot.lane.b32.xlu0 %v325, 126
      %v339 = vpop.permute.xlu0 %338
      %340 = vrot.lane.b32.xlu0 %v326, 126
      %v341 = vpop.permute.xlu0 %340
      %vm342 = vcmask 1031168
      %v343 = vsel %vm342, %v337, %v339
      %v344 = vsel %vm342, %v339, %v341
      %345 = vrot.lane.b32.xlu0 %v324, 110
      %v346 = vpop.permute.xlu0 %345
      %347 = vrot.lane.b32.xlu0 %v325, 110
      %v348 = vpop.permute.xlu0 %347
      %349 = vrot.lane.b32.xlu0 %v326, 110
      %v350 = vpop.permute.xlu0 %349
      %vm351 = vcmask 900096
      %v352 = vsel %vm351, %v346, %v348
      %v353 = vsel %vm351, %v348, %v350
      %354 = vrot.lane.b32.xlu0 %v324, 109
      %v355 = vpop.permute.xlu0 %354
      %356 = vrot.lane.b32.xlu0 %v325, 109
      %v357 = vpop.permute.xlu0 %356
      %358 = vrot.lane.b32.xlu0 %v326, 109
      %v359 = vpop.permute.xlu0 %358
      %vm360 = vcmask 891904
      %v361 = vsel %vm360, %v355, %v357
      %v362 = vsel %vm360, %v357, %v359
      %363 = vrot.lane.b32.xlu0 %v324, 108
      %v364 = vpop.permute.xlu0 %363
      %365 = vrot.lane.b32.xlu0 %v325, 108
      %v366 = vpop.permute.xlu0 %365
      %367 = vrot.lane.b32.xlu0 %v326, 108
      %v368 = vpop.permute.xlu0 %367
      %vm369 = vcmask 883712
      %v370 = vsel %vm369, %v364, %v366
      %v371 = vsel %vm369, %v366, %v368
      %372 = vrot.lane.b32.xlu0 %v324, 92
      %v373 = vpop.permute.xlu0 %372
      %374 = vrot.lane.b32.xlu0 %v325, 92
      %v375 = vpop.permute.xlu0 %374
      %376 = vrot.lane.b32.xlu0 %v326, 92
      %v377 = vpop.permute.xlu0 %376
      %vm378 = vcmask 752640
      %v379 = vsel %vm378, %v373, %v375
      %v380 = vsel %vm378, %v375, %v377
      %381 = vrot.lane.b32.xlu0 %v324, 91
      %v382 = vpop.permute.xlu0 %381
      %383 = vrot.lane.b32.xlu0 %v325, 91
      %v384 = vpop.permute.xlu0 %383
      %385 = vrot.lane.b32.xlu0 %v326, 91
      %v386 = vpop.permute.xlu0 %385
      %vm387 = vcmask 744448
      %v388 = vsel %vm387, %v382, %v384
      %v389 = vsel %vm387, %v384, %v386
      %390 = vrot.lane.b32.xlu0 %v324, 90
      %v391 = vpop.permute.xlu0 %390
      %392 = vrot.lane.b32.xlu0 %v325, 90
      %v393 = vpop.permute.xlu0 %392
      %394 = vrot.lane.b32.xlu0 %v326, 90
      %v395 = vpop.permute.xlu0 %394
      %vm396 = vcmask 736256
      %v397 = vsel %vm396, %v391, %v393
      %v398 = vsel %vm396, %v393, %v395
      %vm399 = vcmask 1043456
      %v402 = vsel %vm399, %v324, %v334
      %v406 = vsel %vm399, %v325, %v335
      %v410 = vsel %vm399, %v326, %v332
      %v414 = vsel %vm399, %v343, %v352
      %v418 = vsel %vm399, %v344, %v353
      %v422 = vsel %vm399, %v341, %v350
      %v426 = vsel %vm399, %v361, %v370
      %v430 = vsel %vm399, %v362, %v371
      %v434 = vsel %vm399, %v359, %v368
      %v438 = vsel %vm399, %v379, %v388
      %v442 = vsel %vm399, %v380, %v389
      %v446 = vsel %vm399, %v377, %v386
      %v448 = vld [vmem:[%s304] sm:$0xff]
      %v449 = vld [vmem:[%s304 + $0x8] sm:$0xf]
      %v452 = vunpack.c.l.b16 %v448
      %v453 = vunpack.c.h.b16 %v448
      %v454 = vunpack.c.l.b16 %v449
      %v455 = vpack.c.b16 %v452, %v452
      %v456 = vpack.c.b16 %v453, %v453
      %v457 = vpack.c.b16 %v454, %v454
      %458 = vrot.lane.b32.xlu0 %v455, 127
      %v459 = vpop.permute.xlu0 %458
      %460 = vrot.lane.b32.xlu0 %v456, 127
      %v461 = vpop.permute.xlu0 %460
      %462 = vrot.lane.b32.xlu0 %v457, 127
      %v463 = vpop.permute.xlu0 %462
      %v464 = vsel %vm333, %v459, %v461
      %v465 = vsel %vm333, %v461, %v463
      %466 = vrot.lane.b32.xlu0 %v455, 126
      %v467 = vpop.permute.xlu0 %466
      %468 = vrot.lane.b32.xlu0 %v456, 126
      %v469 = vpop.permute.xlu0 %468
      %470 = vrot.lane.b32.xlu0 %v457, 126
      %v471 = vpop.permute.xlu0 %470
      %v472 = vsel %vm342, %v467, %v469
      %v473 = vsel %vm342, %v469, %v471
      %474 = vrot.lane.b32.xlu0 %v455, 110
      %v475 = vpop.permute.xlu0 %474
      %476 = vrot.lane.b32.xlu0 %v456, 110
      %v477 = vpop.permute.xlu0 %476
      %478 = vrot.lane.b32.xlu0 %v457, 110
      %v479 = vpop.permute.xlu0 %478
      %v480 = vsel %vm351, %v475, %v477
      %v481 = vsel %vm351, %v477, %v479
      %482 = vrot.lane.b32.xlu0 %v455, 109
      %v483 = vpop.permute.xlu0 %482
      %484 = vrot.lane.b32.xlu0 %v456, 109
      %v485 = vpop.permute.xlu0 %484
      %486 = vrot.lane.b32.xlu0 %v457, 109
      %v487 = vpop.permute.xlu0 %486
      %v488 = vsel %vm360, %v483, %v485
      %v489 = vsel %vm360, %v485, %v487
      %490 = vrot.lane.b32.xlu0 %v455, 108
      %v491 = vpop.permute.xlu0 %490
      %492 = vrot.lane.b32.xlu0 %v456, 108
      %v493 = vpop.permute.xlu0 %492
      %494 = vrot.lane.b32.xlu0 %v457, 108
      %v495 = vpop.permute.xlu0 %494
      %v496 = vsel %vm369, %v491, %v493
      %v497 = vsel %vm369, %v493, %v495
      %498 = vrot.lane.b32.xlu0 %v455, 92
      %v499 = vpop.permute.xlu0 %498
      %500 = vrot.lane.b32.xlu0 %v456, 92
      %v501 = vpop.permute.xlu0 %500
      %502 = vrot.lane.b32.xlu0 %v457, 92
      %v503 = vpop.permute.xlu0 %502
      %v504 = vsel %vm378, %v499, %v501
      %v505 = vsel %vm378, %v501, %v503
      %506 = vrot.lane.b32.xlu0 %v455, 91
      %v507 = vpop.permute.xlu0 %506
      %508 = vrot.lane.b32.xlu0 %v456, 91
      %v509 = vpop.permute.xlu0 %508
      %510 = vrot.lane.b32.xlu0 %v457, 91
      %v511 = vpop.permute.xlu0 %510
      %v512 = vsel %vm387, %v507, %v509
      %v513 = vsel %vm387, %v509, %v511
      %514 = vrot.lane.b32.xlu0 %v455, 90
      %v515 = vpop.permute.xlu0 %514
      %516 = vrot.lane.b32.xlu0 %v456, 90
      %v517 = vpop.permute.xlu0 %516
      %518 = vrot.lane.b32.xlu0 %v457, 90
      %v519 = vpop.permute.xlu0 %518
      %v520 = vsel %vm396, %v515, %v517
      %v521 = vsel %vm396, %v517, %v519
      %v524 = vsel %vm399, %v455, %v464
      %v527 = vsel %vm399, %v456, %v465
      %v530 = vsel %vm399, %v457, %v463
      %v533 = vsel %vm399, %v472, %v480
      %v536 = vsel %vm399, %v473, %v481
      %v539 = vsel %vm399, %v471, %v479
      %v542 = vsel %vm399, %v488, %v496
      %v545 = vsel %vm399, %v489, %v497
      %v548 = vsel %vm399, %v487, %v495
      %v551 = vsel %vm399, %v504, %v512
      %v554 = vsel %vm399, %v505, %v513
      %v557 = vsel %vm399, %v503, %v511
      %vm570 = vcmask 1043456
      %v571 = vrot.slane %v524, 4
      %v572 = vrot.slane %v527, 4
      %v573 = vrot.slane %v530, 4
      %v574 = vrot.slane %v533, 4
      %v575 = vsel %vm570, %v571, %v574
      %v576 = vrot.slane %v536, 4
      %v577 = vsel %vm570, %v572, %v576
      %v578 = vrot.slane %v539, 4
      %v579 = vsel %vm570, %v573, %v578
      %v580 = vrot.slane %v542, 4
      %v581 = vsel %vm570, %v574, %v580
      %v582 = vrot.slane %v545, 4
      %v583 = vsel %vm570, %v576, %v582
      %v584 = vrot.slane %v548, 4
      %v585 = vsel %vm570, %v578, %v584
      %v586 = vrot.slane %v551, 4
      %v587 = vsel %vm570, %v580, %v586
      %v588 = vrot.slane %v554, 4
      %v589 = vsel %vm570, %v582, %v588
      %v590 = vrot.slane %v557, 4
      %v591 = vsel %vm570, %v584, %v590
      %v592 = vrot.slane %v520, 4
      %v593 = vsel %vm570, %v586, %v592
      %v594 = vrot.slane %v521, 4
      %v595 = vsel %vm570, %v588, %v594
      %v596 = vrot.slane %v519, 4
      %v597 = vsel %vm570, %v590, %v596
      %v612 = vsel %vm399, %v397, %v571
      %v616 = vsel %vm399, %v398, %v572
      %v620 = vsel %vm399, %v395, %v573
      %v622 = vld [vmem:[%s2] sm:$0xff]
      %v623 = vld [vmem:[%s3] sm:$0xff]
      %625 = vset.pattern.permute.xlu0 0
      %626 = vperm.xlu0 %625, %v623
      %v627 = vpop.permute.xlu0 %626
      %v630 = vunpack.c.l.b16 %v622
      %v631 = vunpack.c.h.b16 %v622
      %v632 = vpack.c.b16 %v630, %v630
      %v633 = vpack.c.b16 %v631, %v631
      %vm635 = vcmask 130048
      %v637 = vsel %vm635, %v633, 0
      %639 = vmatprep.subr.bf16.mxu0 %v406
      %640 = vmatpush1.bf16.msra.mxu0 %v402
      %641 = vmatprep.subr.bf16.mxu0 %v418
      %642 = vmatpush1.bf16.msra.mxu0 %v414
      %643 = vmatprep.subr.bf16.mxu0 %v430
      %644 = vmatpush1.bf16.msra.mxu0 %v426
      %645 = vmatprep.subr.bf16.mxu0 %v442
      %646 = vmatpush1.bf16.msra.mxu0 %v438
      %647 = vmatprep.subr.bf16.mxu0 %v616
      %648 = vmatpush1.bf16.msra.mxu0 %v612
      %649 = vmatprep.subr.bf16.mxu0 %v577
      %650 = vmatpush1.bf16.msra.mxu0 %v575
      %651 = vmatprep.subr.bf16.mxu0 %v583
      %652 = vmatpush1.bf16.msra.mxu0 %v581
      %653 = vmatprep.subr.bf16.mxu0 %v589
      %654 = vmatpush1.bf16.msra.mxu0 %v587
      %655 = vmatprep.subr.bf16.mxu0 %v595
      %656 = vmatpush1.bf16.msra.mxu0 %v593
      %657 = vmatprep.subr.bf16.mxu0 0
      %658 = vmatpush1.bf16.msra.mxu0 0
      %659 = vmatprep.subr.bf16.mxu0 0
      %660 = vmatpush1.bf16.msra.mxu0 0
      %661 = vmatprep.subr.bf16.mxu0 0
      %662 = vmatpush1.bf16.msra.mxu0 0
      %663 = vmatprep.subr.bf16.mxu0 0
      %664 = vmatpush1.bf16.msra.mxu0 0
      %665 = vmatprep.subr.bf16.mxu0 0
      %666 = vmatpush1.bf16.msra.mxu0 0
      %667 = vmatprep.subr.bf16.mxu0 0
      %668 = vmatpush1.bf16.msra.mxu0 0
      %669 = vmatprep.subr.bf16.mxu0 0
      %670 = vmatpush1.bf16.msra.mxu0 0
      %671 = vmatprep.mubr.bf16.mxu0 %v637
      %672 = vmatmul.mubr.bf16.gmra.mrb[0].mxu0 %v632
      %v673 = vpop.f32.mrb[0].mxu0
      %v674 = vadd.f32 %v627, %v673
      %v675 = vpop.f32.mrb[0].mxu0
      %v676 = vadd.f32 %v627, %v675
      %v677 = vpop.f32.mrb[0].mxu0
      %v678 = vpop.f32.mrb[0].mxu0
      %679 = vdwg.mxu0
      %680 = vmatprep.subr.bf16.mxu0 0
      %681 = vmatpush1.bf16.msra.mxu0 %v410
      %682 = vmatprep.subr.bf16.mxu0 0
      %683 = vmatpush1.bf16.msra.mxu0 %v422
      %684 = vmatprep.subr.bf16.mxu0 0
      %685 = vmatpush1.bf16.msra.mxu0 %v434
      %686 = vmatprep.subr.bf16.mxu0 0
      %687 = vmatpush1.bf16.msra.mxu0 %v446
      %688 = vmatprep.subr.bf16.mxu0 0
      %689 = vmatpush1.bf16.msra.mxu0 %v620
      %690 = vmatprep.subr.bf16.mxu0 0
      %691 = vmatpush1.bf16.msra.mxu0 %v579
      %692 = vmatprep.subr.bf16.mxu0 0
      %693 = vmatpush1.bf16.msra.mxu0 %v585
      %694 = vmatprep.subr.bf16.mxu0 0
      %695 = vmatpush1.bf16.msra.mxu0 %v591
      %696 = vmatprep.subr.bf16.mxu0 0
      %697 = vmatpush1.bf16.msra.mxu0 %v597
      %698 = vmatprep.subr.bf16.mxu0 0
      %699 = vmatpush1.bf16.msra.mxu0 0
      %700 = vmatprep.subr.bf16.mxu0 0
      %701 = vmatpush1.bf16.msra.mxu0 0
      %702 = vmatprep.subr.bf16.mxu0 0
      %703 = vmatpush1.bf16.msra.mxu0 0
      %704 = vmatprep.subr.bf16.mxu0 0
      %705 = vmatpush1.bf16.msra.mxu0 0
      %706 = vmatprep.subr.bf16.mxu0 0
      %707 = vmatpush1.bf16.msra.mxu0 0
      %708 = vmatprep.subr.bf16.mxu0 0
      %709 = vmatpush1.bf16.msra.mxu0 0
      %710 = vmatprep.subr.bf16.mxu0 0
      %711 = vmatpush1.bf16.msra.mxu0 0
      %712 = vmatprep.mubr.bf16.mxu0 %v637
      %713 = vmatmul.mubr.bf16.gmra.mrb[0].mxu0 %v632
      %v714 = vpop.f32.mrb[0].mxu0
      %v715 = vadd.f32 %v627, %v714
      %v716 = vpop.f32.mrb[0].mxu0
      %v717 = vpop.f32.mrb[0].mxu0
      %v718 = vpop.f32.mrb[0].mxu0
      %719 = vdwg.mxu0
      %v720 = vld [vmem:[%s4] sm:$0x7]
      %v722 = vlaneseq
      %v723 = vshrl.u32 %v722, 7
      %v724 = vsub.s32 0, %v723
      %v725 = vrot.slane %v720, %v724
      %v726 = vlaneseq
      %v727 = vshrl.u32 %v726, 7
      %v728 = vsub.s32 1, %v727
      %v729 = vrot.slane %v720, %v728
      %v730 = vlaneseq
      %v731 = vshrl.u32 %v730, 7
      %v732 = vsub.s32 2, %v731
      %v733 = vrot.slane %v720, %v732
      %v737 = vmul.f32 %v674, %v725
      %v738 = vmul.f32 %v676, %v729
      %v739 = vmul.f32 %v715, %v733
      %v740 = vadd.f32 %v737, %v738
      %vm741 = vcmask 261120
      %v742 = vsel %vm741, %v739, 0.0
      %v743 = vadd.f32 %v740, %v742
      %744 = vadd.xlane.f32.xlu0 %v743
      %v745 = vpop.xlane.xlu0 %744
      %v747 = vlaneseq
      %v748 = vand.u32 %v747, 127
      %v749 = vlaneseq
      %v750 = vshrl.u32 %v749, 7
      %v751 = vsub.s32 %v748, %v750
      %v752 = vrot.slane %v745, %v751
      %vm754 = vcmask 57344
      %755 = vst.msk [vmem:[%s312] sm:$0x1] %vm754, %v752
      %v756 = vmul.f32 %v737, %v737
      %v757 = vmul.f32 %v738, %v738
      %v758 = vmul.f32 %v739, %v739
      %v759 = vadd.f32 %v756, %v757
      %v760 = vsel %vm741, %v758, 0.0
      %v761 = vadd.f32 %v759, %v760
      %762 = vadd.xlane.f32.xlu0 %v761
      %v763 = vpop.xlane.xlu0 %762
      %v765 = vlaneseq
      %v766 = vshrl.u32 %v765, 7
      %v767 = vsub.s32 %v748, %v766
      %v768 = vrot.slane %v763, %v767
      %770 = vst.msk [vmem:[%s315] sm:$0x1] %vm754, %v768
      %774 = vrot.lane.b32.xlu0 %v737, 19
      %v775 = vpop.permute.xlu0 %774
      %776 = vrot.lane.b32.xlu0 %v738, 19
      %v777 = vpop.permute.xlu0 %776
      %778 = vrot.lane.b32.xlu0 %v739, 19
      %v779 = vpop.permute.xlu0 %778
      %vm780 = vcmask 154624
      %v781 = vsel %vm780, %v775, %v777
      %v782 = vsel %vm780, %v777, %v779
      %v786 = vsel %vm780, 0.0, %v775
      %vm787 = vcmask 416768
      %v788 = vsel %vm787, %v782, 0.0
      %789 = vst [vmem:[%s309] sm:$0xff] %v786
      %790 = vst [vmem:[%s309 + $0x8] sm:$0xff] %v781
      %vm791 = vcmask 572416
      %792 = vst.msk [vmem:[%s309 + $0x10] sm:$0xff] %vm791, %v788
      %p793 = scmp.lt.s32.totalorder %s19, 1
      %s794 = scalar_select %p793, %s19, 1
      %s795 = smul.addr %s794, 3
      %s796 = smul.addr %s795, 8
      %s797 = scalar_lea.vmem %s5, %s796
      %p798 = scmp.lt.s32.totalorder %s19, 1
      %s799 = scalar_select %p798, %s19, 1
      %s800 = scalar_lea.vmem %s6, %s799
      %p801 = scmp.lt.s32.totalorder %s19, 1
      %s802 = scalar_select %p801, %s19, 1
      %s803 = scalar_lea.vmem %s7, %s802
      // Predicated region
      $region41: #{up_forward.3} parent=39 // pred_check
        %p804 = pneg %p152
      $region42: #{up_forward.3} parent=39 // pred_check_branch
        %806 = sbr.rel (%p804) target = $region44
      $region43: #{up_forward.3} parent=39 // pred_region
        _
      $region44: #{up_forward.3} parent=39 // pred_fallthru
        _
      // Predicated region
      $region45: #{up_forward.3} parent=39 // pred_check
        %p807 = pneg %p178
      $region46: #{up_forward.3} parent=39 // pred_check_branch
        %809 = sbr.rel (%p807) target = $region48
      $region47: #{up_forward.3} parent=39 // pred_region
        _
      $region48: #{up_forward.3} parent=39 // pred_fallthru
        _
      // Predicated region
      $region49: #{up_forward.3} parent=39 // pred_check
        %p810 = pneg %p204
      $region50: #{up_forward.3} parent=39 // pred_check_branch
        %812 = sbr.rel (%p810) target = $region52
      $region51: #{up_forward.3} parent=39 // pred_region
        _
      $region52: #{up_forward.3} parent=39 // pred_fallthru
        _
    $region40: #{up_forward.3} parent=5 // pred_fallthru
      _
    %p813 = scmp.le.s32.totalorder 2, %s14
    // Predicated region
    $region53: #{up_forward.3} parent=5 // pred_check
      %p814 = pneg %p813
    $region54: #{up_forward.3} parent=5 // pred_check_branch
      %816 = sbr.rel (%p814) target = $region56
    $region55: #{up_forward.3} parent=5 // pred_region
      %s817 = ssub.s32 %s14, 2
      // Predicated region
      $region57: #{up_forward.3} parent=55 // pred_check
        %p818 = pneg %p158
      $region58: #{up_forward.3} parent=55 // pred_check_branch
        %820 = sbr.rel (%p818) target = $region60
      $region59: #{up_forward.3} parent=55 // pred_region
        %p821 = scmp.lt.s32.totalorder %s20, 1
        %s822 = scalar_select %p821, %s20, 1
        %s823 = smul.addr %s822, 3
        %s824 = smul.addr %s823, 8
        %s825 = scalar_lea.vmem %s5, %s824
      $region60: #{up_forward.3} parent=55 // pred_fallthru
        _
      // Predicated region
      $region61: #{up_forward.3} parent=55 // pred_check
        %p826 = pneg %p184
      $region62: #{up_forward.3} parent=55 // pred_check_branch
        %828 = sbr.rel (%p826) target = $region64
      $region63: #{up_forward.3} parent=55 // pred_region
        %p829 = scmp.lt.s32.totalorder %s20, 1
        %s830 = scalar_select %p829, %s20, 1
        %s831 = scalar_lea.vmem %s6, %s830
      $region64: #{up_forward.3} parent=55 // pred_fallthru
        _
      // Predicated region
      $region65: #{up_forward.3} parent=55 // pred_check
        %p832 = pneg %p210
      $region66: #{up_forward.3} parent=55 // pred_check_branch
        %834 = sbr.rel (%p832) target = $region68
      $region67: #{up_forward.3} parent=55 // pred_region
        %p835 = scmp.lt.s32.totalorder %s20, 1
        %s836 = scalar_select %p835, %s20, 1
        %s837 = scalar_lea.vmem %s7, %s836
      $region68: #{up_forward.3} parent=55 // pred_fallthru
        _
    $region56: #{up_forward.3} parent=5 // pred_fallthru
      _
  $region6: #{up_forward.3} parent=0 // loop_footer
    %s18 = sadd.s32 1, %s14
  $region7: #{up_forward.3} parent=0 // loop_footer_branch
    %13 = sbr.rel target = $region3
  $region8: #{up_forward.3} parent=0 // loop_exit
    _

</llo_original>
